<compile_context>
chip_gen: v7x
topology: tpu7x:2x2x1
jax: 0.10.0
libtpu: 0.0.40
codegen_flags: <defaults>
</compile_context>

<pallas_src>
import jax
import jax.numpy as jnp
from jax.experimental import pallas as pl
from jax.experimental.pallas import tpu as pltpu


# --------------------------------------------------------------------------
# Fused AttnBlock kernel: one grid step per batch element.
# --------------------------------------------------------------------------
def _make_attn_block_kernel(eps, spatial, channels, cpg, mxu_dtype):
    inv_count = 1.0 / float(spatial * cpg)      # elements per group
    C = channels
    md = mxu_dtype
    approx_recip = (md != jnp.float32)          # exact reciprocal for f32 check path

    def kernel(x_ref, gamma_ref, beta_ref, mem_ref, memt_ref,
               wqvT_ref, bqv_ref, wk_ref, bk_ref, woT_ref, bo_ref, o_ref):
        x = x_ref[...].astype(jnp.float32)                      # (C, S), lane-dense S

        # ---------------- GroupNorm ----------------
        # Per-channel sums (lane reduce), then one (G,C)x(C,2) matmul for the
        # group sums, and one (C,G)x(G,2) matmul to broadcast mean / inv-std
        # back to channels.  gamma/beta folded into per-channel a, b.
        s1 = jnp.sum(x, axis=1, keepdims=True)                  # (C, 1)
        s2 = jnp.sum(x * x, axis=1, keepdims=True)              # (C, 1)
        s12 = jnp.concatenate([s1, s2], axis=1)                 # (C, 2)
        g12 = jnp.dot(memt_ref[...], s12,
                      preferred_element_type=jnp.float32)       # (G, 2)
        gmean = g12[:, 0:1] * inv_count
        gvar = jnp.maximum(g12[:, 1:2] * inv_count - gmean * gmean, 0.0)
        ginv = jax.lax.rsqrt(gvar + eps)
        gmi = jnp.concatenate([gmean, ginv], axis=1)            # (G, 2)
        c12 = jnp.dot(mem_ref[...], gmi,
                      preferred_element_type=jnp.float32)       # (C, 2)
        a = c12[:, 1:2] * gamma_ref[...]                        # (C, 1)
        b = beta_ref[...] - c12[:, 0:1] * a                     # (C, 1)
        xn = x * a + b                                          # (C, S) f32

        # ---------------- Single-head self-attention ----------------
        xnb = xn.astype(md)                                     # (C, S) narrow copy
        xt = xnb.T                                              # (S, C) transpose on bf16

        # Fused Q(scale-folded) + V projection: (S,C) x (C,2C) -> (S,2C).
        qv = jnp.dot(xt, wqvT_ref[...],
                     preferred_element_type=jnp.float32) + bqv_ref[...]
        q = qv[:, :C]                                           # (S, C), scale pre-folded
        v = qv[:, C:]                                           # (S, C)
        # K in (C, S) layout (avoids any transpose for the scores matmul).
        k = jnp.dot(wk_ref[...], xnb,
                    preferred_element_type=jnp.float32) + bk_ref[...]   # (C, S)

        scores = jnp.dot(q.astype(md), k.astype(md),
                         preferred_element_type=jnp.float32)    # (S, S)
        m = jnp.max(scores, axis=-1, keepdims=True)
        p32 = jnp.exp(scores - m)
        row_sum = jnp.sum(p32, axis=-1, keepdims=True)          # (S, 1) f32
        p = p32.astype(md)                                      # half-width (S,S) operand

        attn = jnp.dot(p, v.astype(md),
                       preferred_element_type=jnp.float32)      # (S, C) unnormalized
        attn = attn * pl.reciprocal(row_sum, approx=approx_recip)

        y = jnp.dot(attn.astype(md), woT_ref[...],
                    preferred_element_type=jnp.float32) + bo_ref[...]   # (S, C)

        # ---------------- residual add, back to (C, S) ----------------
        o_ref[...] = (y.T + x).astype(o_ref.dtype)

    return kernel


def attn_block_forward(x_nchw, params, num_groups=32, eps=1e-6,
                       mxu_dtype=jnp.bfloat16):
    """x_nchw: (N, C, H, W). Returns (N, C, H, W).

    params:
      gn_gamma, gn_beta : (C,)
      in_proj_w         : (3C, C)   PyTorch Linear weight (q, k, v stacked)
      in_proj_b         : (3C,)
      out_proj_w        : (C, C)
      out_proj_b        : (C,)

    mxu_dtype=jnp.bfloat16 (default) gives full-rate MXU matmuls on
    v5e/v6e/v7x; accumulation and all elementwise math stay f32.
    Pass mxu_dtype=jnp.float32 for an exact-math path.
    """
    N, C, H, W = x_nchw.shape
    S = H * W
    G = num_groups
    cpg = C // G
    assert C % G == 0 and S % 128 == 0 and C % 8 == 0

    # Free reshape: stays contiguous NCHW, S in the lane dim.
    x2 = x_nchw.reshape(N, C, S)

    # channel -> group membership (C, G) and its transpose (kept f32 so the
    # GroupNorm statistics accumulate at full precision).
    member = (jnp.arange(C)[:, None] // cpg ==
              jnp.arange(G)[None, :]).astype(jnp.float32)
    memberT = member.T

    w_in = params["in_proj_w"].astype(jnp.float32)
    b_in = params["in_proj_b"].astype(jnp.float32)
    wq, wk, wv = w_in[0:C], w_in[C:2 * C], w_in[2 * C:3 * C]
    bq, bk, bv = b_in[0:C], b_in[C:2 * C], b_in[2 * C:3 * C]
    wo = params["out_proj_w"].astype(jnp.float32)
    bo = params["out_proj_b"].astype(jnp.float32)

    scale = 1.0 / float(C) ** 0.5
    # Fold the attention scale into Q; fuse Q and V weights into one (C, 2C)
    # RHS; pre-cast all MXU operand weights to the narrow dtype in the wrapper.
    wqvT = jnp.concatenate([(scale * wq).T, wv.T], axis=1).astype(mxu_dtype)  # (C, 2C)
    bqv = jnp.concatenate([scale * bq, bv]).reshape(1, 2 * C)                  # f32
    wk_m = wk.astype(mxu_dtype)                                                # (C, C)
    woT = wo.T.astype(mxu_dtype)                                               # (C, C)

    args = [
        x2,
        params["gn_gamma"].reshape(C, 1).astype(jnp.float32),
        params["gn_beta"].reshape(C, 1).astype(jnp.float32),
        member, memberT,
        wqvT, bqv,
        wk_m, bk.reshape(C, 1),
        woT, bo.reshape(1, C),
    ]

    def full_spec(shape):
        return pl.BlockSpec(shape, lambda n: (0, 0))

    in_specs = [
        pl.BlockSpec((None, C, S), lambda n: (n, 0, 0)),
        full_spec((C, 1)), full_spec((C, 1)),
        full_spec((C, G)), full_spec((G, C)),
        full_spec((C, 2 * C)), full_spec((1, 2 * C)),
        full_spec((C, C)), full_spec((C, 1)),
        full_spec((C, C)), full_spec((1, C)),
    ]

    kernel = _make_attn_block_kernel(eps, S, C, cpg, mxu_dtype)
    out = pl.pallas_call(
        kernel,
        out_shape=jax.ShapeDtypeStruct((N, C, S), x_nchw.dtype),
        grid=(N,),
        in_specs=in_specs,
        out_specs=pl.BlockSpec((None, C, S), lambda n: (n, 0, 0)),
        compiler_params=pltpu.CompilerParams(
            dimension_semantics=("parallel",),   # N>=2 -> both v7x TCs busy
        ),
    )(*args)
    return out.reshape(N, C, H, W)


# --------------------------------------------------------------------------
# Pure-JAX reference (correctness check)
# --------------------------------------------------------------------------
def ref_forward(x_nchw, params, num_groups, eps):
    N, C, H, W = x_nchw.shape
    xg = x_nchw.reshape(N, num_groups, C // num_groups, H, W)
    mean = xg.mean(axis=(2, 3, 4), keepdims=True)
    var = xg.var(axis=(2, 3, 4), keepdims=True)
    xn = ((xg - mean) / jnp.sqrt(var + eps)).reshape(N, C, H, W)
    xn = xn * params["gn_gamma"].reshape(1, C, 1, 1) + params["gn_beta"].reshape(1, C, 1, 1)

    t = xn.reshape(N, C, H * W).transpose(0, 2, 1)              # (N, S, C)
    qkv = t @ params["in_proj_w"].T + params["in_proj_b"]
    q, k, v = jnp.split(qkv, 3, axis=-1)
    scores = (q @ k.transpose(0, 2, 1)) / jnp.sqrt(jnp.float32(C))
    p = jax.nn.softmax(scores, axis=-1)
    o = p @ v
    o = o @ params["out_proj_w"].T + params["out_proj_b"]
    o = o.transpose(0, 2, 1).reshape(N, C, H, W)
    return o + x_nchw


if __name__ == "__main__":
    # AttnBlock(in_channels=64, num_groups=32, eps=1e-6)
    # NOTE: SelfAttention(1, in_channels, ...) is the standard single-head
    # attention with a fused Linear(C, 3C) in_proj (with bias) and
    # Linear(C, C) out_proj (with bias), scale = 1/sqrt(d_head).
    N, C, H, W = 2, 64, 16, 16
    G, eps = 32, 1e-6

    key = jax.random.PRNGKey(0)
    ks = jax.random.split(key, 7)
    params = {
        "gn_gamma": 1.0 + 0.1 * jax.random.normal(ks[0], (C,), jnp.float32),
        "gn_beta": 0.1 * jax.random.normal(ks[1], (C,), jnp.float32),
        "in_proj_w": 0.1 * jax.random.normal(ks[2], (3 * C, C), jnp.float32),
        "in_proj_b": 0.1 * jax.random.normal(ks[3], (3 * C,), jnp.float32),
        "out_proj_w": 0.1 * jax.random.normal(ks[4], (C, C), jnp.float32),
        "out_proj_b": 0.1 * jax.random.normal(ks[5], (C,), jnp.float32),
    }
    x = jax.random.normal(ks[6], (N, C, H, W), jnp.float32)      # NCHW input

    # Performance path: bf16 MXU operands (default), f32 accumulation.
    out_bf16 = jax.block_until_ready(
        attn_block_forward(x, params, num_groups=G, eps=eps))
    # Exact-math path (f32 MXU operands) for a tight correctness check.
    out_f32 = jax.block_until_ready(
        attn_block_forward(x, params, num_groups=G, eps=eps,
                           mxu_dtype=jnp.float32))

    ref = ref_forward(x, params, G, eps)
    assert out_bf16.shape == (N, C, H, W)
    err_f32 = float(jnp.max(jnp.abs(out_f32 - ref)))
    err_bf16 = float(jnp.max(jnp.abs(out_bf16 - ref)))
    assert err_f32 < 1e-3, f"f32 path: max abs error too large: {err_f32}"
    assert err_bf16 < 1.2e-1, f"bf16 path: max abs error too large: {err_bf16}"
    print("KERNEL_OK")
</pallas_src>

<mosaic_0001>
module attributes {stable_mosaic.version = 11 : i64} {
  func.func @kernel(%arg0: i32, %arg1: memref<1x64x256xf32, #tpu.memory_space<vmem>>, %arg2: memref<64x1xf32, #tpu.memory_space<vmem>>, %arg3: memref<64x1xf32, #tpu.memory_space<vmem>>, %arg4: memref<64x32xf32, #tpu.memory_space<vmem>>, %arg5: memref<32x64xf32, #tpu.memory_space<vmem>>, %arg6: memref<64x128xbf16, #tpu.memory_space<vmem>>, %arg7: memref<1x128xf32, #tpu.memory_space<vmem>>, %arg8: memref<64x64xbf16, #tpu.memory_space<vmem>>, %arg9: memref<64x1xf32, #tpu.memory_space<vmem>>, %arg10: memref<64x64xbf16, #tpu.memory_space<vmem>>, %arg11: memref<1x64xf32, #tpu.memory_space<vmem>>, %arg12: memref<1x64x256xf32, #tpu.memory_space<vmem>>) attributes {dimension_semantics = [#tpu.dimension_semantics<parallel>], iteration_bounds = array<i64: 2>, scalar_prefetch = 0 : i64, scratch_operands = 0 : i64, tpu.core_type = #tpu.core_type<tc>, window_params = [{transform_indices = @transform_0, window_bounds = array<i64: 1, 64, 256>}, {pipeline_mode = #tpu.pipeline_mode<synchronous>, transform_indices = @transform_1, window_bounds = array<i64: 64, 1>}, {pipeline_mode = #tpu.pipeline_mode<synchronous>, transform_indices = @transform_2, window_bounds = array<i64: 64, 1>}, {pipeline_mode = #tpu.pipeline_mode<synchronous>, transform_indices = @transform_3, window_bounds = array<i64: 64, 32>}, {pipeline_mode = #tpu.pipeline_mode<synchronous>, transform_indices = @transform_4, window_bounds = array<i64: 32, 64>}, {pipeline_mode = #tpu.pipeline_mode<synchronous>, transform_indices = @transform_5, window_bounds = array<i64: 64, 128>}, {pipeline_mode = #tpu.pipeline_mode<synchronous>, transform_indices = @transform_6, window_bounds = array<i64: 1, 128>}, {pipeline_mode = #tpu.pipeline_mode<synchronous>, transform_indices = @transform_7, window_bounds = array<i64: 64, 64>}, {pipeline_mode = #tpu.pipeline_mode<synchronous>, transform_indices = @transform_8, window_bounds = array<i64: 64, 1>}, {pipeline_mode = #tpu.pipeline_mode<synchronous>, transform_indices = @transform_9, window_bounds = array<i64: 64, 64>}, {pipeline_mode = #tpu.pipeline_mode<synchronous>, transform_indices = @transform_10, window_bounds = array<i64: 1, 64>}, {transform_indices = @transform_11, window_bounds = array<i64: 1, 64, 256>}]} {
    %c0 = arith.constant 0 : index
    %c0_0 = arith.constant 0 : index
    %c0_1 = arith.constant 0 : index
    %0 = vector.load %arg1[%c0, %c0_0, %c0_1] : memref<1x64x256xf32, #tpu.memory_space<vmem>>, vector<1x64x256xf32>
    %1 = vector.shape_cast %0 : vector<1x64x256xf32> to vector<64x256xf32>
    %cst = arith.constant dense<0.000000e+00> : vector<64xf32>
    %2 = vector.multi_reduction <add>, %1, %cst [1] : vector<64x256xf32> to vector<64xf32>
    %3 = vector.shape_cast %2 : vector<64xf32> to vector<64x1xf32>
    %4 = arith.mulf %1, %1 : vector<64x256xf32>
    %cst_2 = arith.constant dense<0.000000e+00> : vector<64xf32>
    %5 = vector.multi_reduction <add>, %4, %cst_2 [1] : vector<64x256xf32> to vector<64xf32>
    %6 = vector.shape_cast %5 : vector<64xf32> to vector<64x1xf32>
    %7 = tpu.concatenate %3, %6 in 1 : vector<64x1xf32>, vector<64x1xf32> -> vector<64x2xf32>
    %c0_3 = arith.constant 0 : index
    %c0_4 = arith.constant 0 : index
    %8 = vector.load %arg5[%c0_3, %c0_4] : memref<32x64xf32, #tpu.memory_space<vmem>>, vector<32x64xf32>
    %cst_5 = arith.constant dense<0.000000e+00> : vector<32x2xf32>
    %9 = tpu.matmul %8, %7, %cst_5 {dimension_numbers = #tpu.dot_dimension_numbers<[1], [0], [0], [1], [0, 0, 1, 1], [], []>} : vector<32x64xf32>, vector<64x2xf32>, vector<32x2xf32> -> vector<32x2xf32>
    %10 = vector.extract_strided_slice %9 {offsets = [0, 0], sizes = [32, 1], strides = [1, 1]} : vector<32x2xf32> to vector<32x1xf32>
    %cst_6 = arith.constant 0.001953125 : f32
    %11 = vector.broadcast %cst_6 : f32 to vector<32x1xf32>
    %12 = arith.mulf %10, %11 : vector<32x1xf32>
    %13 = vector.extract_strided_slice %9 {offsets = [0, 1], sizes = [32, 1], strides = [1, 1]} : vector<32x2xf32> to vector<32x1xf32>
    %cst_7 = arith.constant 0.001953125 : f32
    %14 = vector.broadcast %cst_7 : f32 to vector<32x1xf32>
    %15 = arith.mulf %13, %14 : vector<32x1xf32>
    %16 = arith.mulf %12, %12 : vector<32x1xf32>
    %17 = arith.subf %15, %16 : vector<32x1xf32>
    %cst_8 = arith.constant 0.000000e+00 : f32
    %18 = vector.broadcast %cst_8 : f32 to vector<32x1xf32>
    %19 = arith.maximumf %17, %18 : vector<32x1xf32>
    %cst_9 = arith.constant 9.99999997E-7 : f32
    %20 = vector.broadcast %cst_9 : f32 to vector<32x1xf32>
    %21 = arith.addf %19, %20 : vector<32x1xf32>
    %22 = math.rsqrt %21 : vector<32x1xf32>
    %23 = tpu.concatenate %12, %22 in 1 : vector<32x1xf32>, vector<32x1xf32> -> vector<32x2xf32>
    %c0_10 = arith.constant 0 : index
    %c0_11 = arith.constant 0 : index
    %24 = vector.load %arg4[%c0_10, %c0_11] : memref<64x32xf32, #tpu.memory_space<vmem>>, vector<64x32xf32>
    %cst_12 = arith.constant dense<0.000000e+00> : vector<64x2xf32>
    %25 = tpu.matmul %24, %23, %cst_12 {dimension_numbers = #tpu.dot_dimension_numbers<[1], [0], [0], [1], [0, 0, 1, 1], [], []>} : vector<64x32xf32>, vector<32x2xf32>, vector<64x2xf32> -> vector<64x2xf32>
    %26 = vector.extract_strided_slice %25 {offsets = [0, 1], sizes = [64, 1], strides = [1, 1]} : vector<64x2xf32> to vector<64x1xf32>
    %c0_13 = arith.constant 0 : index
    %c0_14 = arith.constant 0 : index
    %27 = vector.load %arg2[%c0_13, %c0_14] : memref<64x1xf32, #tpu.memory_space<vmem>>, vector<64x1xf32>
    %28 = arith.mulf %26, %27 : vector<64x1xf32>
    %c0_15 = arith.constant 0 : index
    %c0_16 = arith.constant 0 : index
    %29 = vector.load %arg3[%c0_15, %c0_16] : memref<64x1xf32, #tpu.memory_space<vmem>>, vector<64x1xf32>
    %30 = vector.extract_strided_slice %25 {offsets = [0, 0], sizes = [64, 1], strides = [1, 1]} : vector<64x2xf32> to vector<64x1xf32>
    %31 = arith.mulf %30, %28 : vector<64x1xf32>
    %32 = arith.subf %29, %31 : vector<64x1xf32>
    %33 = vector.broadcast %28 : vector<64x1xf32> to vector<64x256xf32>
    %34 = arith.mulf %1, %33 : vector<64x256xf32>
    %35 = vector.broadcast %32 : vector<64x1xf32> to vector<64x256xf32>
    %36 = arith.addf %34, %35 : vector<64x256xf32>
    %37 = arith.truncf %36 : vector<64x256xf32> to vector<64x256xbf16>
    %38 = tpu.transpose %37, [1, 0] : vector<64x256xbf16> -> vector<256x64xbf16>
    %c0_17 = arith.constant 0 : index
    %c0_18 = arith.constant 0 : index
    %39 = vector.load %arg6[%c0_17, %c0_18] : memref<64x128xbf16, #tpu.memory_space<vmem>>, vector<64x128xbf16>
    %cst_19 = arith.constant dense<0.000000e+00> : vector<256x128xf32>
    %40 = tpu.matmul %38, %39, %cst_19 {dimension_numbers = #tpu.dot_dimension_numbers<[1], [0], [0], [1], [0, 0, 1, 1], [], []>} : vector<256x64xbf16>, vector<64x128xbf16>, vector<256x128xf32> -> vector<256x128xf32>
    %c0_20 = arith.constant 0 : index
    %c0_21 = arith.constant 0 : index
    %41 = vector.load %arg7[%c0_20, %c0_21] : memref<1x128xf32, #tpu.memory_space<vmem>>, vector<1x128xf32>
    %42 = vector.broadcast %41 : vector<1x128xf32> to vector<256x128xf32>
    %43 = arith.addf %40, %42 : vector<256x128xf32>
    %44 = vector.extract_strided_slice %43 {offsets = [0, 0], sizes = [256, 64], strides = [1, 1]} : vector<256x128xf32> to vector<256x64xf32>
    %45 = vector.extract_strided_slice %43 {offsets = [0, 64], sizes = [256, 64], strides = [1, 1]} : vector<256x128xf32> to vector<256x64xf32>
    %c0_22 = arith.constant 0 : index
    %c0_23 = arith.constant 0 : index
    %46 = vector.load %arg8[%c0_22, %c0_23] : memref<64x64xbf16, #tpu.memory_space<vmem>>, vector<64x64xbf16>
    %cst_24 = arith.constant dense<0.000000e+00> : vector<64x256xf32>
    %47 = tpu.matmul %46, %37, %cst_24 {dimension_numbers = #tpu.dot_dimension_numbers<[1], [0], [0], [1], [0, 0, 1, 1], [], []>} : vector<64x64xbf16>, vector<64x256xbf16>, vector<64x256xf32> -> vector<64x256xf32>
    %c0_25 = arith.constant 0 : index
    %c0_26 = arith.constant 0 : index
    %48 = vector.load %arg9[%c0_25, %c0_26] : memref<64x1xf32, #tpu.memory_space<vmem>>, vector<64x1xf32>
    %49 = vector.broadcast %48 : vector<64x1xf32> to vector<64x256xf32>
    %50 = arith.addf %47, %49 : vector<64x256xf32>
    %51 = arith.truncf %44 : vector<256x64xf32> to vector<256x64xbf16>
    %52 = arith.truncf %50 : vector<64x256xf32> to vector<64x256xbf16>
    %cst_27 = arith.constant dense<0.000000e+00> : vector<256x256xf32>
    %53 = tpu.matmul %51, %52, %cst_27 {dimension_numbers = #tpu.dot_dimension_numbers<[1], [0], [0], [1], [0, 0, 1, 1], [], []>} : vector<256x64xbf16>, vector<64x256xbf16>, vector<256x256xf32> -> vector<256x256xf32>
    %cst_28 = arith.constant dense<0xFF800000> : vector<256xf32>
    %54 = vector.multi_reduction <maximumf>, %53, %cst_28 [1] : vector<256x256xf32> to vector<256xf32>
    %55 = vector.shape_cast %54 : vector<256xf32> to vector<256x1xf32>
    %56 = vector.broadcast %55 : vector<256x1xf32> to vector<256x256xf32>
    %57 = arith.subf %53, %56 : vector<256x256xf32>
    %58 = math.exp %57 : vector<256x256xf32>
    %cst_29 = arith.constant dense<0.000000e+00> : vector<256xf32>
    %59 = vector.multi_reduction <add>, %58, %cst_29 [1] : vector<256x256xf32> to vector<256xf32>
    %60 = vector.shape_cast %59 : vector<256xf32> to vector<256x1xf32>
    %61 = arith.truncf %58 : vector<256x256xf32> to vector<256x256xbf16>
    %62 = arith.truncf %45 : vector<256x64xf32> to vector<256x64xbf16>
    %cst_30 = arith.constant dense<0.000000e+00> : vector<256x64xf32>
    %63 = tpu.matmul %61, %62, %cst_30 {dimension_numbers = #tpu.dot_dimension_numbers<[1], [0], [0], [1], [0, 0, 1, 1], [], []>} : vector<256x256xbf16>, vector<256x64xbf16>, vector<256x64xf32> -> vector<256x64xf32>
    %64 = tpu.reciprocal %60 {approx = true} : vector<256x1xf32> -> vector<256x1xf32>
    %65 = vector.broadcast %64 : vector<256x1xf32> to vector<256x64xf32>
    %66 = arith.mulf %63, %65 : vector<256x64xf32>
    %67 = arith.truncf %66 : vector<256x64xf32> to vector<256x64xbf16>
    %c0_31 = arith.constant 0 : index
    %c0_32 = arith.constant 0 : index
    %68 = vector.load %arg10[%c0_31, %c0_32] : memref<64x64xbf16, #tpu.memory_space<vmem>>, vector<64x64xbf16>
    %cst_33 = arith.constant dense<0.000000e+00> : vector<256x64xf32>
    %69 = tpu.matmul %67, %68, %cst_33 {dimension_numbers = #tpu.dot_dimension_numbers<[1], [0], [0], [1], [0, 0, 1, 1], [], []>} : vector<256x64xbf16>, vector<64x64xbf16>, vector<256x64xf32> -> vector<256x64xf32>
    %c0_34 = arith.constant 0 : index
    %c0_35 = arith.constant 0 : index
    %70 = vector.load %arg11[%c0_34, %c0_35] : memref<1x64xf32, #tpu.memory_space<vmem>>, vector<1x64xf32>
    %71 = vector.broadcast %70 : vector<1x64xf32> to vector<256x64xf32>
    %72 = arith.addf %69, %71 : vector<256x64xf32>
    %73 = tpu.transpose %72, [1, 0] : vector<256x64xf32> -> vector<64x256xf32>
    %74 = arith.addf %73, %1 : vector<64x256xf32>
    %c0_36 = arith.constant 0 : index
    %c0_37 = arith.constant 0 : index
    %c0_38 = arith.constant 0 : index
    %75 = vector.load %arg12[%c0_36, %c0_37, %c0_38] : memref<1x64x256xf32, #tpu.memory_space<vmem>>, vector<1x64x256xf32>
    %76 = vector.shape_cast %75 : vector<1x64x256xf32> to vector<64x256xf32>
    %77 = vector.shape_cast %74 : vector<64x256xf32> to vector<1x64x256xf32>
    tpu.vector_store %arg12[%c0_36, %c0_37, %c0_38], %77 {strides = array<i32>} : memref<1x64x256xf32, #tpu.memory_space<vmem>>, vector<1x64x256xf32>,
    return
  }
  func.func @transform_0(%arg0: i32) -> (i32, i32, i32) {
    %c0_i32 = arith.constant 0 : i32
    %c0_i32_0 = arith.constant 0 : i32
    %c0_i32_1 = arith.constant 0 : i32
    return %arg0, %c0_i32, %c0_i32_0 : i32, i32, i32
  }
  func.func @transform_1(%arg0: i32) -> (i32, i32) {
    %c0_i32 = arith.constant 0 : i32
    %c0_i32_0 = arith.constant 0 : i32
    %c0_i32_1 = arith.constant 0 : i32
    return %c0_i32, %c0_i32_0 : i32, i32
  }
  func.func @transform_2(%arg0: i32) -> (i32, i32) {
    %c0_i32 = arith.constant 0 : i32
    %c0_i32_0 = arith.constant 0 : i32
    %c0_i32_1 = arith.constant 0 : i32
    return %c0_i32, %c0_i32_0 : i32, i32
  }
  func.func @transform_3(%arg0: i32) -> (i32, i32) {
    %c0_i32 = arith.constant 0 : i32
    %c0_i32_0 = arith.constant 0 : i32
    %c0_i32_1 = arith.constant 0 : i32
    return %c0_i32, %c0_i32_0 : i32, i32
  }
  func.func @transform_4(%arg0: i32) -> (i32, i32) {
    %c0_i32 = arith.constant 0 : i32
    %c0_i32_0 = arith.constant 0 : i32
    %c0_i32_1 = arith.constant 0 : i32
    return %c0_i32, %c0_i32_0 : i32, i32
  }
  func.func @transform_5(%arg0: i32) -> (i32, i32) {
    %c0_i32 = arith.constant 0 : i32
    %c0_i32_0 = arith.constant 0 : i32
    %c0_i32_1 = arith.constant 0 : i32
    return %c0_i32, %c0_i32_0 : i32, i32
  }
  func.func @transform_6(%arg0: i32) -> (i32, i32) {
    %c0_i32 = arith.constant 0 : i32
    %c0_i32_0 = arith.constant 0 : i32
    %c0_i32_1 = arith.constant 0 : i32
    return %c0_i32, %c0_i32_0 : i32, i32
  }
  func.func @transform_7(%arg0: i32) -> (i32, i32) {
    %c0_i32 = arith.constant 0 : i32
    %c0_i32_0 = arith.constant 0 : i32
    %c0_i32_1 = arith.constant 0 : i32
    return %c0_i32, %c0_i32_0 : i32, i32
  }
  func.func @transform_8(%arg0: i32) -> (i32, i32) {
    %c0_i32 = arith.constant 0 : i32
    %c0_i32_0 = arith.constant 0 : i32
    %c0_i32_1 = arith.constant 0 : i32
    return %c0_i32, %c0_i32_0 : i32, i32
  }
  func.func @transform_9(%arg0: i32) -> (i32, i32) {
    %c0_i32 = arith.constant 0 : i32
    %c0_i32_0 = arith.constant 0 : i32
    %c0_i32_1 = arith.constant 0 : i32
    return %c0_i32, %c0_i32_0 : i32, i32
  }
  func.func @transform_10(%arg0: i32) -> (i32, i32) {
    %c0_i32 = arith.constant 0 : i32
    %c0_i32_0 = arith.constant 0 : i32
    %c0_i32_1 = arith.constant 0 : i32
    return %c0_i32, %c0_i32_0 : i32, i32
  }
  func.func @transform_11(%arg0: i32) -> (i32, i32, i32) {
    %c0_i32 = arith.constant 0 : i32
    %c0_i32_0 = arith.constant 0 : i32
    %c0_i32_1 = arith.constant 0 : i32
    return %arg0, %c0_i32, %c0_i32_0 : i32, i32, i32
  }
}

</mosaic_0001>

<llo_original>
// kernel: tpu_custom_call.1
$region0: #{tpu_custom_call.1}
  #allocation0 [shape = 'u32[]', space=smem, size = 0x4, offset = 0x4, fixed_abs, tag = 'smem constant byte address 0x4 - core index']
  #allocation1 [shape = 'u32[144,128]{1,0:T(1,128)}', space=vmem, size = 0x12000, scoped, tag = 'internal scratch']
  %s0 = inlined_call_operand.vmem [shape: f32[2,64,256], index: 0, kind: input, shape index: {}]
  %s1 = inlined_call_operand.vmem [shape: f32[64,1], index: 1, kind: input, shape index: {}]
  %s2 = inlined_call_operand.vmem [shape: f32[64,1], index: 2, kind: input, shape index: {}]
  %s3 = inlined_call_operand.vmem [shape: f32[64,32], index: 3, kind: input, shape index: {}]
  %s4 = inlined_call_operand.hbm [shape: f32[32,64], index: 4, kind: input, shape index: {}]
  %s5 = inlined_call_operand.hbm [shape: bf16[64,128], index: 5, kind: input, shape index: {}]
  %s6 = inlined_call_operand.hbm [shape: f32[1,128], index: 6, kind: input, shape index: {}]
  %s7 = inlined_call_operand.hbm [shape: bf16[64,64], index: 7, kind: input, shape index: {}]
  %s8 = inlined_call_operand.vmem [shape: f32[64,1], index: 8, kind: input, shape index: {}]
  %s9 = inlined_call_operand.vmem [shape: bf16[64,64], index: 9, kind: input, shape index: {}]
  %s10 = inlined_call_operand.vmem [shape: f32[1,64], index: 10, kind: input, shape index: {}]
  %s11 = inlined_call_operand.hbm [shape: f32[2,64,256], index: 11, kind: output, shape index: {}]
  %s12 = sld [smem:[#allocation0]]
  $region93: #{tpu_custom_call.1} parent=0
    _
  %s14 = ssub.s32 1, %s12
  %s15 = scalar_select 0, %s14, %s12
  $region1: #{tpu_custom_call.1} parent=0
    #allocation2 [shape = 'u8[16384]{0}', space=vmem, size = 0x4000, scoped, tag = 'input window, operand 4, single buffered']
    #allocation3 [shape = 's32[2]{0}', space=sflag, size = 0x8, scoped, tag = 'scoped memory for tpu_custom_call.1']
    #allocation4 [shape = 's32[2]{0}', space=sflag, size = 0x8, scoped, tag = 'scoped memory for tpu_custom_call.1']
    #allocation5 [shape = 'u8[16384]{0}', space=vmem, size = 0x4000, scoped, tag = 'input window, operand 5, single buffered']
    #allocation6 [shape = 's32[1]{0}', space=sflag, size = 0x4, scoped, tag = 'scoped memory for tpu_custom_call.1']
    #allocation7 [shape = 'u8[512]{0}', space=vmem, size = 0x400, scoped, tag = 'input window, operand 6, single buffered']
    #allocation8 [shape = 'u8[16384]{0}', space=vmem, size = 0x4000, scoped, tag = 'input window, operand 7, single buffered']
    #allocation9 [shape = 's32[1]{0}', space=sflag, size = 0x4, scoped, tag = 'scoped memory for tpu_custom_call.1']
    #allocation10 [shape = 'u8[131072]{0}', space=vmem, size = 0x20000, scoped, tag = 'output window, operand 0']
    %16 = vsyncpa [#allocation3], 0
    %17 = vsyncpa [#allocation6], 0
    %18 = vsyncpa [#allocation9], 0
    %19 = vsyncpa [#allocation4], 0
    %s20 = scalar_lea.sflag [#allocation4], 1
    %21 = vsyncpa %s20, 0
    loop: start=0, step=1, limit=4
    $region2: #{tpu_custom_call.1} parent=1 // loop_pre_header
      _
    $region3: #{tpu_custom_call.1} parent=1 // loop_header
      %s23 = sphi 0, %s27
      %p24 = scmp.ge.s32.totalorder %s23, 4
      %s33 = sphi 0, %s35
      %s36 = sphi 0, %s33
      %s37 = sphi 0, %s36
      %s53 = sphi 0, %s37
      %s57 = sphi 0, %s57
      %s59 = sphi 0, %s57
      %s60 = sphi 0, %s59
      %s74 = sphi 0, %s60
      %s78 = sphi 0, %s78
      %s80 = sphi 0, %s78
      %s81 = sphi 0, %s80
      %s95 = sphi 0, %s81
      %s99 = sphi 0, %s99
      %s101 = sphi 0, %s99
      %s102 = sphi 0, %s101
      %s116 = sphi 0, %s102
      %s120 = sphi 0, %s120
      %s122 = sphi 0, %s120
      %s123 = sphi 0, %s122
      %s137 = sphi 0, %s123
      %s141 = sphi 0, %s141
      %s143 = sphi 0, %s141
      %s144 = sphi 0, %s143
      %s158 = sphi 0, %s144
      %s162 = sphi 0, %s162
      %s164 = sphi 0, %s162
      %s165 = sphi 0, %s164
      %s179 = sphi 0, %s165
      %s183 = sphi 0, %s183
      %s185 = sphi 0, %s183
      %s186 = sphi 0, %s185
      %s200 = sphi 0, %s186
      %s204 = sphi 0, %s204
      %s206 = sphi 0, %s204
      %s207 = sphi 0, %s206
      %s221 = sphi 0, %s207
      %s225 = sphi 0, %s225
      %s227 = sphi 0, %s225
      %s228 = sphi 0, %s227
      %s242 = sphi 0, %s228
      %s246 = sphi 0, %s246
      %s248 = sphi 0, %s246
      %s249 = sphi 0, %s248
      %s263 = sphi 0, %s249
      %s269 = sphi 0, %s271
      %s272 = sphi 0, %s269
      %s273 = sphi 0, %s272
      %s289 = sphi 0, %s273
    $region4: #{tpu_custom_call.1} parent=1 // loop_header_branch
      %26 = sbr.rel (%p24) target = $region8
    $region5: #{tpu_custom_call.1} parent=1 // loop_body
      %s28 = ssub.s32 %s23, 1
      %s29 = ssub.s32 %s23, 2
      %s30 = sadd.s32 %s23, 1
      %s31 = ssub.s32 %s23, %s30
      %p32 = scmp.eq.s32.totalorder %s31, 0
      %s34 = sadd.s32 %s33, 1
      %s35 = scalar_select %p32, %s33, %s34
      %p38 = pneg %p32
      %p39 = scmp.eq.s32.totalorder %s23, 1
      %p40 = por %p38, %p39
      %p41 = scmp.ne.s32.totalorder %s33, %s36
      %p42 = scmp.eq.s32.totalorder %s23, 0
      %p43 = por %p41, %p42
      %p44 = scmp.ne.s32.totalorder %s33, %s36
      %p45 = scmp.eq.s32.totalorder %s28, 1
      %p46 = por %p44, %p45
      %p47 = scmp.ne.s32.totalorder %s36, %s37
      %p48 = scmp.eq.s32.totalorder %s28, 0
      %p49 = por %p47, %p48
      %p50 = scmp.ne.s32.totalorder %s36, %s37
      %p51 = scmp.eq.s32.totalorder %s29, 1
      %p52 = por %p50, %p51
      %p54 = scmp.ne.s32.totalorder %s37, %s53
      %p55 = scmp.eq.s32.totalorder %s29, 0
      %p56 = por %p54, %p55
      %s58 = sadd.s32 %s57, 1
      %p61 = scmp.eq.s32.totalorder %s23, 1
      %p62 = scmp.ne.s32.totalorder %s57, %s59
      %p63 = scmp.eq.s32.totalorder %s23, 0
      %p64 = por %p62, %p63
      %p65 = scmp.ne.s32.totalorder %s57, %s59
      %p66 = scmp.eq.s32.totalorder %s28, 1
      %p67 = por %p65, %p66
      %p68 = scmp.ne.s32.totalorder %s59, %s60
      %p69 = scmp.eq.s32.totalorder %s28, 0
      %p70 = por %p68, %p69
      %p71 = scmp.ne.s32.totalorder %s59, %s60
      %p72 = scmp.eq.s32.totalorder %s29, 1
      %p73 = por %p71, %p72
      %p75 = scmp.ne.s32.totalorder %s60, %s74
      %p76 = scmp.eq.s32.totalorder %s29, 0
      %p77 = por %p75, %p76
      %s79 = sadd.s32 %s78, 1
      %p82 = scmp.eq.s32.totalorder %s23, 1
      %p83 = scmp.ne.s32.totalorder %s78, %s80
      %p84 = scmp.eq.s32.totalorder %s23, 0
      %p85 = por %p83, %p84
      %p86 = scmp.ne.s32.totalorder %s78, %s80
      %p87 = scmp.eq.s32.totalorder %s28, 1
      %p88 = por %p86, %p87
      %p89 = scmp.ne.s32.totalorder %s80, %s81
      %p90 = scmp.eq.s32.totalorder %s28, 0
      %p91 = por %p89, %p90
      %p92 = scmp.ne.s32.totalorder %s80, %s81
      %p93 = scmp.eq.s32.totalorder %s29, 1
      %p94 = por %p92, %p93
      %p96 = scmp.ne.s32.totalorder %s81, %s95
      %p97 = scmp.eq.s32.totalorder %s29, 0
      %p98 = por %p96, %p97
      %s100 = sadd.s32 %s99, 1
      %p103 = scmp.eq.s32.totalorder %s23, 1
      %p104 = scmp.ne.s32.totalorder %s99, %s101
      %p105 = scmp.eq.s32.totalorder %s23, 0
      %p106 = por %p104, %p105
      %p107 = scmp.ne.s32.totalorder %s99, %s101
      %p108 = scmp.eq.s32.totalorder %s28, 1
      %p109 = por %p107, %p108
      %p110 = scmp.ne.s32.totalorder %s101, %s102
      %p111 = scmp.eq.s32.totalorder %s28, 0
      %p112 = por %p110, %p111
      %p113 = scmp.ne.s32.totalorder %s101, %s102
      %p114 = scmp.eq.s32.totalorder %s29, 1
      %p115 = por %p113, %p114
      %p117 = scmp.ne.s32.totalorder %s102, %s116
      %p118 = scmp.eq.s32.totalorder %s29, 0
      %p119 = por %p117, %p118
      %s121 = sadd.s32 %s120, 1
      %p124 = scmp.eq.s32.totalorder %s23, 1
      %p125 = scmp.ne.s32.totalorder %s120, %s122
      %p126 = scmp.eq.s32.totalorder %s23, 0
      %p127 = por %p125, %p126
      %p128 = scmp.ne.s32.totalorder %s120, %s122
      %p129 = scmp.eq.s32.totalorder %s28, 1
      %p130 = por %p128, %p129
      %p131 = scmp.ne.s32.totalorder %s122, %s123
      %p132 = scmp.eq.s32.totalorder %s28, 0
      %p133 = por %p131, %p132
      %p134 = scmp.ne.s32.totalorder %s122, %s123
      %p135 = scmp.eq.s32.totalorder %s29, 1
      %p136 = por %p134, %p135
      %p138 = scmp.ne.s32.totalorder %s123, %s137
      %p139 = scmp.eq.s32.totalorder %s29, 0
      %p140 = por %p138, %p139
      %s142 = sadd.s32 %s141, 1
      %p145 = scmp.eq.s32.totalorder %s23, 1
      %p146 = scmp.ne.s32.totalorder %s141, %s143
      %p147 = scmp.eq.s32.totalorder %s23, 0
      %p148 = por %p146, %p147
      %p149 = scmp.ne.s32.totalorder %s141, %s143
      %p150 = scmp.eq.s32.totalorder %s28, 1
      %p151 = por %p149, %p150
      %p152 = scmp.ne.s32.totalorder %s143, %s144
      %p153 = scmp.eq.s32.totalorder %s28, 0
      %p154 = por %p152, %p153
      %p155 = scmp.ne.s32.totalorder %s143, %s144
      %p156 = scmp.eq.s32.totalorder %s29, 1
      %p157 = por %p155, %p156
      %p159 = scmp.ne.s32.totalorder %s144, %s158
      %p160 = scmp.eq.s32.totalorder %s29, 0
      %p161 = por %p159, %p160
      %s163 = sadd.s32 %s162, 1
      %p166 = scmp.eq.s32.totalorder %s23, 1
      %p167 = scmp.ne.s32.totalorder %s162, %s164
      %p168 = scmp.eq.s32.totalorder %s23, 0
      %p169 = por %p167, %p168
      %p170 = scmp.ne.s32.totalorder %s162, %s164
      %p171 = scmp.eq.s32.totalorder %s28, 1
      %p172 = por %p170, %p171
      %p173 = scmp.ne.s32.totalorder %s164, %s165
      %p174 = scmp.eq.s32.totalorder %s28, 0
      %p175 = por %p173, %p174
      %p176 = scmp.ne.s32.totalorder %s164, %s165
      %p177 = scmp.eq.s32.totalorder %s29, 1
      %p178 = por %p176, %p177
      %p180 = scmp.ne.s32.totalorder %s165, %s179
      %p181 = scmp.eq.s32.totalorder %s29, 0
      %p182 = por %p180, %p181
      %s184 = sadd.s32 %s183, 1
      %p187 = scmp.eq.s32.totalorder %s23, 1
      %p188 = scmp.ne.s32.totalorder %s183, %s185
      %p189 = scmp.eq.s32.totalorder %s23, 0
      %p190 = por %p188, %p189
      %p191 = scmp.ne.s32.totalorder %s183, %s185
      %p192 = scmp.eq.s32.totalorder %s28, 1
      %p193 = por %p191, %p192
      %p194 = scmp.ne.s32.totalorder %s185, %s186
      %p195 = scmp.eq.s32.totalorder %s28, 0
      %p196 = por %p194, %p195
      %p197 = scmp.ne.s32.totalorder %s185, %s186
      %p198 = scmp.eq.s32.totalorder %s29, 1
      %p199 = por %p197, %p198
      %p201 = scmp.ne.s32.totalorder %s186, %s200
      %p202 = scmp.eq.s32.totalorder %s29, 0
      %p203 = por %p201, %p202
      %s205 = sadd.s32 %s204, 1
      %p208 = scmp.eq.s32.totalorder %s23, 1
      %p209 = scmp.ne.s32.totalorder %s204, %s206
      %p210 = scmp.eq.s32.totalorder %s23, 0
      %p211 = por %p209, %p210
      %p212 = scmp.ne.s32.totalorder %s204, %s206
      %p213 = scmp.eq.s32.totalorder %s28, 1
      %p214 = por %p212, %p213
      %p215 = scmp.ne.s32.totalorder %s206, %s207
      %p216 = scmp.eq.s32.totalorder %s28, 0
      %p217 = por %p215, %p216
      %p218 = scmp.ne.s32.totalorder %s206, %s207
      %p219 = scmp.eq.s32.totalorder %s29, 1
      %p220 = por %p218, %p219
      %p222 = scmp.ne.s32.totalorder %s207, %s221
      %p223 = scmp.eq.s32.totalorder %s29, 0
      %p224 = por %p222, %p223
      %s226 = sadd.s32 %s225, 1
      %p229 = scmp.eq.s32.totalorder %s23, 1
      %p230 = scmp.ne.s32.totalorder %s225, %s227
      %p231 = scmp.eq.s32.totalorder %s23, 0
      %p232 = por %p230, %p231
      %p233 = scmp.ne.s32.totalorder %s225, %s227
      %p234 = scmp.eq.s32.totalorder %s28, 1
      %p235 = por %p233, %p234
      %p236 = scmp.ne.s32.totalorder %s227, %s228
      %p237 = scmp.eq.s32.totalorder %s28, 0
      %p238 = por %p236, %p237
      %p239 = scmp.ne.s32.totalorder %s227, %s228
      %p240 = scmp.eq.s32.totalorder %s29, 1
      %p241 = por %p239, %p240
      %p243 = scmp.ne.s32.totalorder %s228, %s242
      %p244 = scmp.eq.s32.totalorder %s29, 0
      %p245 = por %p243, %p244
      %s247 = sadd.s32 %s246, 1
      %p250 = scmp.eq.s32.totalorder %s23, 1
      %p251 = scmp.ne.s32.totalorder %s246, %s248
      %p252 = scmp.eq.s32.totalorder %s23, 0
      %p253 = por %p251, %p252
      %p254 = scmp.ne.s32.totalorder %s246, %s248
      %p255 = scmp.eq.s32.totalorder %s28, 1
      %p256 = por %p254, %p255
      %p257 = scmp.ne.s32.totalorder %s248, %s249
      %p258 = scmp.eq.s32.totalorder %s28, 0
      %p259 = por %p257, %p258
      %p260 = scmp.ne.s32.totalorder %s248, %s249
      %p261 = scmp.eq.s32.totalorder %s29, 1
      %p262 = por %p260, %p261
      %p264 = scmp.ne.s32.totalorder %s249, %s263
      %p265 = scmp.eq.s32.totalorder %s29, 0
      %p266 = por %p264, %p265
      %s267 = ssub.s32 %s23, %s30
      %p268 = scmp.eq.s32.totalorder %s267, 0
      %s270 = sadd.s32 %s269, 1
      %s271 = scalar_select %p268, %s269, %s270
      %p274 = pneg %p268
      %p275 = scmp.eq.s32.totalorder %s23, 1
      %p276 = por %p274, %p275
      %p277 = scmp.ne.s32.totalorder %s269, %s272
      %p278 = scmp.eq.s32.totalorder %s23, 0
      %p279 = por %p277, %p278
      %p280 = scmp.ne.s32.totalorder %s269, %s272
      %p281 = scmp.eq.s32.totalorder %s28, 1
      %p282 = por %p280, %p281
      %p283 = scmp.ne.s32.totalorder %s272, %s273
      %p284 = scmp.eq.s32.totalorder %s28, 0
      %p285 = por %p283, %p284
      %p286 = scmp.ne.s32.totalorder %s272, %s273
      %p287 = scmp.eq.s32.totalorder %s29, 1
      %p288 = por %p286, %p287
      %p290 = scmp.ne.s32.totalorder %s273, %s289
      %p291 = scmp.eq.s32.totalorder %s29, 0
      %p292 = por %p290, %p291
      %p293 = scmp.le.s32.totalorder 1, %s23
      %p294 = scmp.lt.s32.totalorder %s23, 3
      %p295 = pnand %p293, %p294
      %p296 = pneg %p295
      // Predicated region
      $region9: #{tpu_custom_call.1} parent=5 // pred_check
        _
      $region10: #{tpu_custom_call.1} parent=5 // pred_check_branch
        %298 = sbr.rel (%p295) target = $region12
      $region11: #{tpu_custom_call.1} parent=5 // pred_region
        %s299 = ssub.s32 %s23, 1
        // Predicated region
        $region13: #{tpu_custom_call.1} parent=11 // pred_check
          %p300 = pneg %p70
        $region14: #{tpu_custom_call.1} parent=11 // pred_check_branch
          %302 = sbr.rel (%p300) target = $region16
        $region15: #{tpu_custom_call.1} parent=11 // pred_region
          _
        $region16: #{tpu_custom_call.1} parent=11 // pred_fallthru
          _
        // Predicated region
        $region17: #{tpu_custom_call.1} parent=11 // pred_check
          %p303 = pneg %p91
        $region18: #{tpu_custom_call.1} parent=11 // pred_check_branch
          %305 = sbr.rel (%p303) target = $region20
        $region19: #{tpu_custom_call.1} parent=11 // pred_region
          _
        $region20: #{tpu_custom_call.1} parent=11 // pred_fallthru
          _
        // Predicated region
        $region21: #{tpu_custom_call.1} parent=11 // pred_check
          %p306 = pneg %p112
        $region22: #{tpu_custom_call.1} parent=11 // pred_check_branch
          %308 = sbr.rel (%p306) target = $region24
        $region23: #{tpu_custom_call.1} parent=11 // pred_region
          _
        $region24: #{tpu_custom_call.1} parent=11 // pred_fallthru
          _
        // Predicated region
        $region25: #{tpu_custom_call.1} parent=11 // pred_check
          %p309 = pneg %p133
        $region26: #{tpu_custom_call.1} parent=11 // pred_check_branch
          %311 = sbr.rel (%p309) target = $region28
        $region27: #{tpu_custom_call.1} parent=11 // pred_region
          %s313 = ssub.s32 512, 512
          %314 = vsyncadd [#allocation3], %s313
          %s315 = sshll.u32 [#allocation2], 4
          %s316 = int_to_ptr.vmem [resolvable:$true] %s315
          %321 = dma.hbm_to_vmem [thread:$0]  %s4, 512, %s316, [#allocation3], 128, 128, 8
        $region28: #{tpu_custom_call.1} parent=11 // pred_fallthru
          _
        // Predicated region
        $region29: #{tpu_custom_call.1} parent=11 // pred_check
          %p322 = pneg %p154
        $region30: #{tpu_custom_call.1} parent=11 // pred_check_branch
          %324 = sbr.rel (%p322) target = $region32
        $region31: #{tpu_custom_call.1} parent=11 // pred_region
          %s326 = ssub.s32 512, 512
          %327 = vsyncadd [#allocation6], %s326
          %s328 = sshll.u32 [#allocation5], 4
          %s329 = int_to_ptr.vmem [resolvable:$true] %s328
          %334 = dma.hbm_to_vmem [thread:$0]  %s5, 512, %s329, [#allocation6], 64, 64, 4
        $region32: #{tpu_custom_call.1} parent=11 // pred_fallthru
          _
        // Predicated region
        $region33: #{tpu_custom_call.1} parent=11 // pred_check
          %p335 = pneg %p175
        $region34: #{tpu_custom_call.1} parent=11 // pred_check_branch
          %337 = sbr.rel (%p335) target = $region36
        $region35: #{tpu_custom_call.1} parent=11 // pred_region
          %s339 = ssub.s32 16, 16
          %340 = vsyncadd [#allocation6], %s339
          %s342 = sshll.u32 [#allocation7], 4
          %s343 = int_to_ptr.vmem [resolvable:$true] %s342
          %345 = dma.hbm_to_vmem [thread:$0]  %s6, 16, %s343, [#allocation6]
        $region36: #{tpu_custom_call.1} parent=11 // pred_fallthru
          _
        // Predicated region
        $region37: #{tpu_custom_call.1} parent=11 // pred_check
          %p346 = pneg %p196
        $region38: #{tpu_custom_call.1} parent=11 // pred_check_branch
          %348 = sbr.rel (%p346) target = $region40
        $region39: #{tpu_custom_call.1} parent=11 // pred_region
          %s350 = ssub.s32 512, 512
          %351 = vsyncadd [#allocation9], %s350
          %s352 = sshll.u32 [#allocation8], 4
          %s353 = int_to_ptr.vmem [resolvable:$true] %s352
          %358 = dma.hbm_to_vmem [thread:$0]  %s7, 512, %s353, [#allocation9], 64, 64, 4
        $region40: #{tpu_custom_call.1} parent=11 // pred_fallthru
          _
        // Predicated region
        $region41: #{tpu_custom_call.1} parent=11 // pred_check
          %p359 = pneg %p217
        $region42: #{tpu_custom_call.1} parent=11 // pred_check_branch
          %361 = sbr.rel (%p359) target = $region44
        $region43: #{tpu_custom_call.1} parent=11 // pred_region
          _
        $region44: #{tpu_custom_call.1} parent=11 // pred_fallthru
          _
        // Predicated region
        $region45: #{tpu_custom_call.1} parent=11 // pred_check
          %p362 = pneg %p238
        $region46: #{tpu_custom_call.1} parent=11 // pred_check_branch
          %364 = sbr.rel (%p362) target = $region48
        $region47: #{tpu_custom_call.1} parent=11 // pred_region
          _
        $region48: #{tpu_custom_call.1} parent=11 // pred_fallthru
          _
        // Predicated region
        $region49: #{tpu_custom_call.1} parent=11 // pred_check
          %p365 = pneg %p259
        $region50: #{tpu_custom_call.1} parent=11 // pred_check_branch
          %367 = sbr.rel (%p365) target = $region52
        $region51: #{tpu_custom_call.1} parent=11 // pred_region
          _
        $region52: #{tpu_custom_call.1} parent=11 // pred_fallthru
          _
      $region12: #{tpu_custom_call.1} parent=5 // pred_fallthru
        _
      %p368 = scmp.lt.s32.totalorder %s23, 2
      // Predicated region
      $region53: #{tpu_custom_call.1} parent=5 // pred_check
        %p369 = pneg %p368
      $region54: #{tpu_custom_call.1} parent=5 // pred_check_branch
        %371 = sbr.rel (%p369) target = $region56
      $region55: #{tpu_custom_call.1} parent=5 // pred_region
        // Predicated region
        $region57: #{tpu_custom_call.1} parent=55 // pred_check
          %p372 = pneg %p43
        $region58: #{tpu_custom_call.1} parent=55 // pred_check_branch
          %374 = sbr.rel (%p372) target = $region60
        $region59: #{tpu_custom_call.1} parent=55 // pred_region
          %p375 = scmp.lt.s32.totalorder %s23, 1
          %s376 = scalar_select %p375, %s23, 1
          %s377 = smul.addr %s376, 16
          %s378 = smul.addr %s377, 8
          %s379 = scalar_lea.vmem %s0, %s378
        $region60: #{tpu_custom_call.1} parent=55 // pred_fallthru
          _
      $region56: #{tpu_custom_call.1} parent=5 // pred_fallthru
        _
      %p380 = scmp.le.s32.totalorder 1, %s23
      %p381 = scmp.lt.s32.totalorder %s23, 3
      %p382 = pnand %p380, %p381
      %p383 = pneg %p382
      // Predicated region
      $region61: #{tpu_custom_call.1} parent=5 // pred_check
        _
      $region62: #{tpu_custom_call.1} parent=5 // pred_check_branch
        %385 = sbr.rel (%p382) target = $region64
      $region63: #{tpu_custom_call.1} parent=5 // pred_region
        %s386 = ssub.s32 %s23, 1
        // Predicated region
        $region65: #{tpu_custom_call.1} parent=63 // pred_check
          %p387 = pneg %p133
        $region66: #{tpu_custom_call.1} parent=63 // pred_check_branch
          %389 = sbr.rel (%p387) target = $region68
        $region67: #{tpu_custom_call.1} parent=63 // pred_region
          %390 = dma.done [#allocation3], 512
        $region68: #{tpu_custom_call.1} parent=63 // pred_fallthru
          _
        // Predicated region
        $region69: #{tpu_custom_call.1} parent=63 // pred_check
          %p391 = pneg %p154
        $region70: #{tpu_custom_call.1} parent=63 // pred_check_branch
          %393 = sbr.rel (%p391) target = $region72
        $region71: #{tpu_custom_call.1} parent=63 // pred_region
          %394 = dma.done [#allocation6], 512
        $region72: #{tpu_custom_call.1} parent=63 // pred_fallthru
          _
        // Predicated region
        $region73: #{tpu_custom_call.1} parent=63 // pred_check
          %p395 = pneg %p175
        $region74: #{tpu_custom_call.1} parent=63 // pred_check_branch
          %397 = sbr.rel (%p395) target = $region76
        $region75: #{tpu_custom_call.1} parent=63 // pred_region
          %398 = dma.done [#allocation6], 16
        $region76: #{tpu_custom_call.1} parent=63 // pred_fallthru
          _
        // Predicated region
        $region77: #{tpu_custom_call.1} parent=63 // pred_check
          %p399 = pneg %p196
        $region78: #{tpu_custom_call.1} parent=63 // pred_check_branch
          %401 = sbr.rel (%p399) target = $region80
        $region79: #{tpu_custom_call.1} parent=63 // pred_region
          %402 = dma.done [#allocation9], 512
        $region80: #{tpu_custom_call.1} parent=63 // pred_fallthru
          _
        %p403 = scmp.lt.s32.totalorder %s28, 1
        %s404 = scalar_select %p403, %s28, 1
        %s405 = smul.addr %s404, 16
        %s406 = smul.addr %s405, 8
        %s407 = scalar_lea.vmem %s0, %s406
        %p408 = pneg %p49
        %p409 = pneg %p46
        %p410 = pneg %p70
        %p411 = pneg %p67
        %p412 = pneg %p91
        %p413 = pneg %p88
        %p414 = pneg %p112
        %p415 = pneg %p109
        %p416 = pneg %p133
        %p417 = pneg %p130
        %p418 = pneg %p154
        %p419 = pneg %p151
        %p420 = pneg %p175
        %p421 = pneg %p172
        %p422 = pneg %p196
        %p423 = pneg %p193
        %p424 = pneg %p217
        %p425 = pneg %p214
        %p426 = pneg %p238
        %p427 = pneg %p235
        %p428 = pneg %p259
        %p429 = pneg %p256
        %p430 = pneg %p285
        %p431 = pneg %p282
        %s432 = sand.u32 %s272, 1
        %s433 = scalar_lea.sflag [#allocation4], %s432
        %s434 = sand.u32 %s272, 1
        %s435 = smul.addr %s434, 128
        %s436 = scalar_lea.vmem [#allocation10], %s435
        %p437 = scmp.lt.s32.totalorder %s28, 1
        %s438 = scalar_select %p437, %s28, 1
        %s439 = smul.addr %s438, 16
        %s440 = smul.addr %s439, 8
        %s441 = scalar_lea.vmem %s0, %s440
        %v443 = vld [vmem:[%s441] sm:$0xff]
        %v444 = vld [vmem:[%s441 + $0x8] sm:$0xff]
        %v445 = vld [vmem:[%s441 + $0x10] sm:$0xff]
        %v446 = vld [vmem:[%s441 + $0x18] sm:$0xff]
        %v447 = vld [vmem:[%s441 + $0x20] sm:$0xff]
        %v448 = vld [vmem:[%s441 + $0x28] sm:$0xff]
        %v449 = vld [vmem:[%s441 + $0x30] sm:$0xff]
        %v450 = vld [vmem:[%s441 + $0x38] sm:$0xff]
        %v451 = vld [vmem:[%s441 + $0x40] sm:$0xff]
        %v452 = vld [vmem:[%s441 + $0x48] sm:$0xff]
        %v453 = vld [vmem:[%s441 + $0x50] sm:$0xff]
        %v454 = vld [vmem:[%s441 + $0x58] sm:$0xff]
        %v455 = vld [vmem:[%s441 + $0x60] sm:$0xff]
        %v456 = vld [vmem:[%s441 + $0x68] sm:$0xff]
        %v457 = vld [vmem:[%s441 + $0x70] sm:$0xff]
        %v458 = vld [vmem:[%s441 + $0x78] sm:$0xff]
        %v459 = vadd.f32 %v443, %v444
        %460 = vadd.xlane.f32.xlu0 %v459
        %v461 = vpop.xlane.xlu0 %460
        %v462 = vadd.f32 %v445, %v446
        %463 = vadd.xlane.f32.xlu0 %v462
        %v464 = vpop.xlane.xlu0 %463
        %v465 = vadd.f32 %v447, %v448
        %466 = vadd.xlane.f32.xlu0 %v465
        %v467 = vpop.xlane.xlu0 %466
        %v468 = vadd.f32 %v449, %v450
        %469 = vadd.xlane.f32.xlu0 %v468
        %v470 = vpop.xlane.xlu0 %469
        %v471 = vadd.f32 %v451, %v452
        %472 = vadd.xlane.f32.xlu0 %v471
        %v473 = vpop.xlane.xlu0 %472
        %v474 = vadd.f32 %v453, %v454
        %475 = vadd.xlane.f32.xlu0 %v474
        %v476 = vpop.xlane.xlu0 %475
        %v477 = vadd.f32 %v455, %v456
        %478 = vadd.xlane.f32.xlu0 %v477
        %v479 = vpop.xlane.xlu0 %478
        %v480 = vadd.f32 %v457, %v458
        %481 = vadd.xlane.f32.xlu0 %v480
        %v482 = vpop.xlane.xlu0 %481
        %v483 = vmul.f32 %v443, %v443
        %v484 = vmul.f32 %v444, %v444
        %v485 = vmul.f32 %v445, %v445
        %v486 = vmul.f32 %v446, %v446
        %v487 = vmul.f32 %v447, %v447
        %v488 = vmul.f32 %v448, %v448
        %v489 = vmul.f32 %v449, %v449
        %v490 = vmul.f32 %v450, %v450
        %v491 = vmul.f32 %v451, %v451
        %v492 = vmul.f32 %v452, %v452
        %v493 = vmul.f32 %v453, %v453
        %v494 = vmul.f32 %v454, %v454
        %v495 = vmul.f32 %v455, %v455
        %v496 = vmul.f32 %v456, %v456
        %v497 = vmul.f32 %v457, %v457
        %v498 = vmul.f32 %v458, %v458
        %v499 = vadd.f32 %v483, %v484
        %500 = vadd.xlane.f32.xlu0 %v499
        %v501 = vpop.xlane.xlu0 %500
        %v502 = vadd.f32 %v485, %v486
        %503 = vadd.xlane.f32.xlu0 %v502
        %v504 = vpop.xlane.xlu0 %503
        %v505 = vadd.f32 %v487, %v488
        %506 = vadd.xlane.f32.xlu0 %v505
        %v507 = vpop.xlane.xlu0 %506
        %v508 = vadd.f32 %v489, %v490
        %509 = vadd.xlane.f32.xlu0 %v508
        %v510 = vpop.xlane.xlu0 %509
        %v511 = vadd.f32 %v491, %v492
        %512 = vadd.xlane.f32.xlu0 %v511
        %v513 = vpop.xlane.xlu0 %512
        %v514 = vadd.f32 %v493, %v494
        %515 = vadd.xlane.f32.xlu0 %v514
        %v516 = vpop.xlane.xlu0 %515
        %v517 = vadd.f32 %v495, %v496
        %518 = vadd.xlane.f32.xlu0 %v517
        %v519 = vpop.xlane.xlu0 %518
        %v520 = vadd.f32 %v497, %v498
        %521 = vadd.xlane.f32.xlu0 %v520
        %v522 = vpop.xlane.xlu0 %521
        %vm523 = vcmask 7168
        %v524 = vsel %vm523, %v461, %v501
        %v525 = vsel %vm523, %v464, %v504
        %v526 = vsel %vm523, %v467, %v507
        %v527 = vsel %vm523, %v470, %v510
        %v528 = vsel %vm523, %v473, %v513
        %v529 = vsel %vm523, %v476, %v516
        %v530 = vsel %vm523, %v479, %v519
        %v531 = vsel %vm523, %v482, %v522
        %v532 = vld [vmem:[#allocation2] sm:$0xff]
        %v533 = vld [vmem:[#allocation2 + $0x8] sm:$0xff]
        %v534 = vld [vmem:[#allocation2 + $0x10] sm:$0xff]
        %v535 = vld [vmem:[#allocation2 + $0x18] sm:$0xff]
        %vm536 = vcmask 523264
        %v538 = vsel %vm536, %v532, 0
        %v541 = vsel %vm536, %v533, 0
        %v544 = vsel %vm536, %v534, 0
        %v547 = vsel %vm536, %v535, 0
        %549 = vmatprep.subr.mxu0 0.0
        %550 = vmatpush1.msra.mxu0 %v524
        %551 = vmatprep.subr.mxu0 0.0
        %552 = vmatpush1.msra.mxu0 %v525
        %553 = vmatprep.subr.mxu0 0.0
        %554 = vmatpush1.msra.mxu0 %v526
        %555 = vmatprep.subr.mxu0 0.0
        %556 = vmatpush1.msra.mxu0 %v527
        %557 = vmatprep.subr.mxu0 0.0
        %558 = vmatpush1.msra.mxu0 %v528
        %559 = vmatprep.subr.mxu0 0.0
        %560 = vmatpush1.msra.mxu0 %v529
        %561 = vmatprep.subr.mxu0 0.0
        %562 = vmatpush1.msra.mxu0 %v530
        %563 = vmatprep.subr.mxu0 0.0
        %564 = vmatpush1.msra.mxu0 %v531
        %565 = vmatprep.subr.mxu0 0.0
        %566 = vmatpush1.msra.mxu0 0.0
        %567 = vmatprep.subr.mxu0 0.0
        %568 = vmatpush1.msra.mxu0 0.0
        %569 = vmatprep.subr.mxu0 0.0
        %570 = vmatpush1.msra.mxu0 0.0
        %571 = vmatprep.subr.mxu0 0.0
        %572 = vmatpush1.msra.mxu0 0.0
        %573 = vmatprep.subr.mxu0 0.0
        %574 = vmatpush1.msra.mxu0 0.0
        %575 = vmatprep.subr.mxu0 0.0
        %576 = vmatpush1.msra.mxu0 0.0
        %577 = vmatprep.subr.mxu0 0.0
        %578 = vmatpush1.msra.mxu0 0.0
        %579 = vmatprep.subr.mxu0 0.0
        %580 = vmatpush1.msra.mxu0 0.0
        %581 = vmatprep.subr.mxu0 0.0
        %582 = vmatpush1.msra.mxu0 0.0
        %583 = vmatprep.subr.mxu0 0.0
        %584 = vmatpush1.msra.mxu0 0.0
        %585 = vmatprep.subr.mxu0 0.0
        %586 = vmatpush1.msra.mxu0 0.0
        %587 = vmatprep.subr.mxu0 0.0
        %588 = vmatpush1.msra.mxu0 0.0
        %589 = vmatprep.subr.mxu0 0.0
        %590 = vmatpush1.msra.mxu0 0.0
        %591 = vmatprep.subr.mxu0 0.0
        %592 = vmatpush1.msra.mxu0 0.0
        %593 = vmatprep.subr.mxu0 0.0
        %594 = vmatpush1.msra.mxu0 0.0
        %595 = vmatprep.subr.mxu0 0.0
        %596 = vmatpush1.msra.mxu0 0.0
        %597 = vmatprep.subr.mxu0 0.0
        %598 = vmatpush1.msra.mxu0 0.0
        %599 = vmatprep.subr.mxu0 0.0
        %600 = vmatpush1.msra.mxu0 0.0
        %601 = vmatprep.subr.mxu0 0.0
        %602 = vmatpush1.msra.mxu0 0.0
        %603 = vmatprep.subr.mxu0 0.0
        %604 = vmatpush1.msra.mxu0 0.0
        %605 = vmatprep.subr.mxu0 0.0
        %606 = vmatpush1.msra.mxu0 0.0
        %607 = vmatprep.subr.mxu0 0.0
        %608 = vmatpush1.msra.mxu0 0.0
        %609 = vmatprep.subr.mxu0 0.0
        %610 = vmatpush1.msra.mxu0 0.0
        %611 = vmatprep.subr.mxu0 0.0
        %612 = vmatpush1.msra.mxu0 0.0
        %613 = vmatprep.mubr.f32.mxu0 0.0
        %614 = vmatmul.mubr.f32.gmra.mrb[0].mxu0 %v538
        %v615 = vpop.f32.mrb[0].mxu0
        %v616 = vadd.f32 0.0, %v615
        %v617 = vpop.f32.mrb[0].mxu0
        %618 = vmatprep.mubr.f32.mxu0 0.0
        %619 = vmatmul.mubr.f32.gmra.mrb[0].mxu0 %v541
        %v620 = vpop.f32.mrb[0].mxu0
        %v621 = vadd.f32 0.0, %v620
        %v622 = vpop.f32.mrb[0].mxu0
        %623 = vmatprep.mubr.f32.mxu0 0.0
        %624 = vmatmul.mubr.f32.gmra.mrb[0].mxu0 %v544
        %v625 = vpop.f32.mrb[0].mxu0
        %v626 = vadd.f32 0.0, %v625
        %v627 = vpop.f32.mrb[0].mxu0
        %628 = vmatprep.mubr.f32.mxu0 0.0
        %629 = vmatmul.mubr.f32.gmra.mrb[0].mxu0 %v547
        %v630 = vpop.f32.mrb[0].mxu0
        %v631 = vadd.f32 0.0, %v630
        %v632 = vpop.f32.mrb[0].mxu0
        %633 = vdwg.mxu0
        %v634 = vmul.f32 %v616, 0.001953125
        %v635 = vmul.f32 %v621, 0.001953125
        %v636 = vmul.f32 %v626, 0.001953125
        %v637 = vmul.f32 %v631, 0.001953125
        %v638 = vmul.f32 %v634, %v634
        %v639 = vmul.f32 %v635, %v635
        %v640 = vmul.f32 %v636, %v636
        %v641 = vmul.f32 %v637, %v637
        %646 = vrot.lane.b32.xlu0 %v638, 1
        %v647 = vpop.permute.xlu0 %646
        %648 = vrot.lane.b32.xlu0 %v639, 1
        %v649 = vpop.permute.xlu0 %648
        %650 = vrot.lane.b32.xlu0 %v640, 1
        %v651 = vpop.permute.xlu0 %650
        %652 = vrot.lane.b32.xlu0 %v641, 1
        %v653 = vpop.permute.xlu0 %652
        %v658 = vsub.f32 %v634, %v647
        %v659 = vsub.f32 %v635, %v649
        %v660 = vsub.f32 %v636, %v651
        %v661 = vsub.f32 %v637, %v653
        %v662 = vmax.f32 %v658, 0.0
        %v663 = vmax.f32 %v659, 0.0
        %v664 = vmax.f32 %v660, 0.0
        %v665 = vmax.f32 %v661, 0.0
        %v666 = vadd.f32 %v662, 1e-06
        %v667 = vadd.f32 %v663, 1e-06
        %v668 = vadd.f32 %v664, 1e-06
        %v669 = vadd.f32 %v665, 1e-06
        %v670 = vrsqrt.pop %v666
        %v671 = vrsqrt.pop %v667
        %v672 = vrsqrt.pop %v668
        %v673 = vrsqrt.pop %v669
        %v674 = vsel %vm523, %v634, %v670
        %v675 = vsel %vm523, %v635, %v671
        %v676 = vsel %vm523, %v636, %v672
        %v677 = vsel %vm523, %v637, %v673
        %v678 = vld [vmem:[%s3] sm:$0xff]
        %v679 = vld [vmem:[%s3 + $0x8] sm:$0xff]
        %v680 = vld [vmem:[%s3 + $0x10] sm:$0xff]
        %v681 = vld [vmem:[%s3 + $0x18] sm:$0xff]
        %v682 = vld [vmem:[%s3 + $0x20] sm:$0xff]
        %v683 = vld [vmem:[%s3 + $0x28] sm:$0xff]
        %v684 = vld [vmem:[%s3 + $0x30] sm:$0xff]
        %v685 = vld [vmem:[%s3 + $0x38] sm:$0xff]
        %vm686 = vcmask 261120
        %v688 = vsel %vm686, %v678, 0
        %v691 = vsel %vm686, %v679, 0
        %v694 = vsel %vm686, %v680, 0
        %v697 = vsel %vm686, %v681, 0
        %v700 = vsel %vm686, %v682, 0
        %v703 = vsel %vm686, %v683, 0
        %v706 = vsel %vm686, %v684, 0
        %v709 = vsel %vm686, %v685, 0
        %711 = vmatprep.subr.mxu0 0.0
        %712 = vmatpush1.msra.mxu0 %v674
        %713 = vmatprep.subr.mxu0 0.0
        %714 = vmatpush1.msra.mxu0 %v675
        %715 = vmatprep.subr.mxu0 0.0
        %716 = vmatpush1.msra.mxu0 %v676
        %717 = vmatprep.subr.mxu0 0.0
        %718 = vmatpush1.msra.mxu0 %v677
        %719 = vmatprep.subr.mxu0 0.0
        %720 = vmatpush1.msra.mxu0 0.0
        %721 = vmatprep.subr.mxu0 0.0
        %722 = vmatpush1.msra.mxu0 0.0
        %723 = vmatprep.subr.mxu0 0.0
        %724 = vmatpush1.msra.mxu0 0.0
        %725 = vmatprep.subr.mxu0 0.0
        %726 = vmatpush1.msra.mxu0 0.0
        %727 = vmatprep.subr.mxu0 0.0
        %728 = vmatpush1.msra.mxu0 0.0
        %729 = vmatprep.subr.mxu0 0.0
        %730 = vmatpush1.msra.mxu0 0.0
        %731 = vmatprep.subr.mxu0 0.0
        %732 = vmatpush1.msra.mxu0 0.0
        %733 = vmatprep.subr.mxu0 0.0
        %734 = vmatpush1.msra.mxu0 0.0
        %735 = vmatprep.subr.mxu0 0.0
        %736 = vmatpush1.msra.mxu0 0.0
        %737 = vmatprep.subr.mxu0 0.0
        %738 = vmatpush1.msra.mxu0 0.0
        %739 = vmatprep.subr.mxu0 0.0
        %740 = vmatpush1.msra.mxu0 0.0
        %741 = vmatprep.subr.mxu0 0.0
        %742 = vmatpush1.msra.mxu0 0.0
        %743 = vmatprep.subr.mxu0 0.0
        %744 = vmatpush1.msra.mxu0 0.0
        %745 = vmatprep.subr.mxu0 0.0
        %746 = vmatpush1.msra.mxu0 0.0
        %747 = vmatprep.subr.mxu0 0.0
        %748 = vmatpush1.msra.mxu0 0.0
        %749 = vmatprep.subr.mxu0 0.0
        %750 = vmatpush1.msra.mxu0 0.0
        %751 = vmatprep.subr.mxu0 0.0
        %752 = vmatpush1.msra.mxu0 0.0
        %753 = vmatprep.subr.mxu0 0.0
        %754 = vmatpush1.msra.mxu0 0.0
        %755 = vmatprep.subr.mxu0 0.0
        %756 = vmatpush1.msra.mxu0 0.0
        %757 = vmatprep.subr.mxu0 0.0
        %758 = vmatpush1.msra.mxu0 0.0
        %759 = vmatprep.subr.mxu0 0.0
        %760 = vmatpush1.msra.mxu0 0.0
        %761 = vmatprep.subr.mxu0 0.0
        %762 = vmatpush1.msra.mxu0 0.0
        %763 = vmatprep.subr.mxu0 0.0
        %764 = vmatpush1.msra.mxu0 0.0
        %765 = vmatprep.subr.mxu0 0.0
        %766 = vmatpush1.msra.mxu0 0.0
        %767 = vmatprep.subr.mxu0 0.0
        %768 = vmatpush1.msra.mxu0 0.0
        %769 = vmatprep.subr.mxu0 0.0
        %770 = vmatpush1.msra.mxu0 0.0
        %771 = vmatprep.subr.mxu0 0.0
        %772 = vmatpush1.msra.mxu0 0.0
        %773 = vmatprep.subr.mxu0 0.0
        %774 = vmatpush1.msra.mxu0 0.0
        %775 = vmatprep.mubr.f32.mxu0 0.0
        %776 = vmatmul.mubr.f32.gmra.mrb[0].mxu0 %v688
        %v777 = vpop.f32.mrb[0].mxu0
        %v778 = vadd.f32 0.0, %v777
        %v779 = vpop.f32.mrb[0].mxu0
        %780 = vmatprep.mubr.f32.mxu0 0.0
        %781 = vmatmul.mubr.f32.gmra.mrb[0].mxu0 %v691
        %v782 = vpop.f32.mrb[0].mxu0
        %v783 = vadd.f32 0.0, %v782
        %v784 = vpop.f32.mrb[0].mxu0
        %785 = vmatprep.mubr.f32.mxu0 0.0
        %786 = vmatmul.mubr.f32.gmra.mrb[0].mxu0 %v694
        %v787 = vpop.f32.mrb[0].mxu0
        %v788 = vadd.f32 0.0, %v787
        %v789 = vpop.f32.mrb[0].mxu0
        %790 = vmatprep.mubr.f32.mxu0 0.0
        %791 = vmatmul.mubr.f32.gmra.mrb[0].mxu0 %v697
        %v792 = vpop.f32.mrb[0].mxu0
        %v793 = vadd.f32 0.0, %v792
        %v794 = vpop.f32.mrb[0].mxu0
        %795 = vmatprep.mubr.f32.mxu0 0.0
        %796 = vmatmul.mubr.f32.gmra.mrb[0].mxu0 %v700
        %v797 = vpop.f32.mrb[0].mxu0
        %v798 = vadd.f32 0.0, %v797
        %v799 = vpop.f32.mrb[0].mxu0
        %800 = vmatprep.mubr.f32.mxu0 0.0
        %801 = vmatmul.mubr.f32.gmra.mrb[0].mxu0 %v703
        %v802 = vpop.f32.mrb[0].mxu0
        %v803 = vadd.f32 0.0, %v802
        %v804 = vpop.f32.mrb[0].mxu0
        %805 = vmatprep.mubr.f32.mxu0 0.0
        %806 = vmatmul.mubr.f32.gmra.mrb[0].mxu0 %v706
        %v807 = vpop.f32.mrb[0].mxu0
        %v808 = vadd.f32 0.0, %v807
        %v809 = vpop.f32.mrb[0].mxu0
        %810 = vmatprep.mubr.f32.mxu0 0.0
        %811 = vmatmul.mubr.f32.gmra.mrb[0].mxu0 %v709
        %v812 = vpop.f32.mrb[0].mxu0
        %v813 = vadd.f32 0.0, %v812
        %v814 = vpop.f32.mrb[0].mxu0
        %815 = vdwg.mxu0
        %v816 = vld [vmem:[%s1] sm:$0xff]
        %v817 = vld [vmem:[%s1 + $0x8] sm:$0xff]
        %v818 = vld [vmem:[%s1 + $0x10] sm:$0xff]
        %v819 = vld [vmem:[%s1 + $0x18] sm:$0xff]
        %v820 = vld [vmem:[%s1 + $0x20] sm:$0xff]
        %v821 = vld [vmem:[%s1 + $0x28] sm:$0xff]
        %v822 = vld [vmem:[%s1 + $0x30] sm:$0xff]
        %v823 = vld [vmem:[%s1 + $0x38] sm:$0xff]
        %832 = vrot.lane.b32.xlu0 %v816, 1
        %v833 = vpop.permute.xlu0 %832
        %834 = vrot.lane.b32.xlu0 %v817, 1
        %v835 = vpop.permute.xlu0 %834
        %836 = vrot.lane.b32.xlu0 %v818, 1
        %v837 = vpop.permute.xlu0 %836
        %838 = vrot.lane.b32.xlu0 %v819, 1
        %v839 = vpop.permute.xlu0 %838
        %840 = vrot.lane.b32.xlu0 %v820, 1
        %v841 = vpop.permute.xlu0 %840
        %842 = vrot.lane.b32.xlu0 %v821, 1
        %v843 = vpop.permute.xlu0 %842
        %844 = vrot.lane.b32.xlu0 %v822, 1
        %v845 = vpop.permute.xlu0 %844
        %846 = vrot.lane.b32.xlu0 %v823, 1
        %v847 = vpop.permute.xlu0 %846
        %v856 = vmul.f32 %v778, %v833
        %v857 = vmul.f32 %v783, %v835
        %v858 = vmul.f32 %v788, %v837
        %v859 = vmul.f32 %v793, %v839
        %v860 = vmul.f32 %v798, %v841
        %v861 = vmul.f32 %v803, %v843
        %v862 = vmul.f32 %v808, %v845
        %v863 = vmul.f32 %v813, %v847
        %v864 = vld [vmem:[%s2] sm:$0xff]
        %v865 = vld [vmem:[%s2 + $0x8] sm:$0xff]
        %v866 = vld [vmem:[%s2 + $0x10] sm:$0xff]
        %v867 = vld [vmem:[%s2 + $0x18] sm:$0xff]
        %v868 = vld [vmem:[%s2 + $0x20] sm:$0xff]
        %v869 = vld [vmem:[%s2 + $0x28] sm:$0xff]
        %v870 = vld [vmem:[%s2 + $0x30] sm:$0xff]
        %v871 = vld [vmem:[%s2 + $0x38] sm:$0xff]
        %880 = vrot.lane.b32.xlu0 %v856, 127
        %v881 = vpop.permute.xlu0 %880
        %882 = vrot.lane.b32.xlu0 %v857, 127
        %v883 = vpop.permute.xlu0 %882
        %884 = vrot.lane.b32.xlu0 %v858, 127
        %v885 = vpop.permute.xlu0 %884
        %886 = vrot.lane.b32.xlu0 %v859, 127
        %v887 = vpop.permute.xlu0 %886
        %888 = vrot.lane.b32.xlu0 %v860, 127
        %v889 = vpop.permute.xlu0 %888
        %890 = vrot.lane.b32.xlu0 %v861, 127
        %v891 = vpop.permute.xlu0 %890
        %892 = vrot.lane.b32.xlu0 %v862, 127
        %v893 = vpop.permute.xlu0 %892
        %894 = vrot.lane.b32.xlu0 %v863, 127
        %v895 = vpop.permute.xlu0 %894
        %v904 = vmul.f32 %v778, %v881
        %v905 = vmul.f32 %v783, %v883
        %v906 = vmul.f32 %v788, %v885
        %v907 = vmul.f32 %v793, %v887
        %v908 = vmul.f32 %v798, %v889
        %v909 = vmul.f32 %v803, %v891
        %v910 = vmul.f32 %v808, %v893
        %v911 = vmul.f32 %v813, %v895
        %v912 = vsub.f32 %v864, %v904
        %v913 = vsub.f32 %v865, %v905
        %v914 = vsub.f32 %v866, %v906
        %v915 = vsub.f32 %v867, %v907
        %v916 = vsub.f32 %v868, %v908
        %v917 = vsub.f32 %v869, %v909
        %v918 = vsub.f32 %v870, %v910
        %v919 = vsub.f32 %v871, %v911
        %920 = vset.pattern.permute.xlu0 1
        %921 = vperm.xlu0 %920, %v856
        %v922 = vpop.permute.xlu0 %921
        %924 = vset.pattern.permute.xlu0 1
        %925 = vperm.xlu0 %924, %v857
        %v926 = vpop.permute.xlu0 %925
        %928 = vset.pattern.permute.xlu0 1
        %929 = vperm.xlu0 %928, %v858
        %v930 = vpop.permute.xlu0 %929
        %932 = vset.pattern.permute.xlu0 1
        %933 = vperm.xlu0 %932, %v859
        %v934 = vpop.permute.xlu0 %933
        %936 = vset.pattern.permute.xlu0 1
        %937 = vperm.xlu0 %936, %v860
        %v938 = vpop.permute.xlu0 %937
        %940 = vset.pattern.permute.xlu0 1
        %941 = vperm.xlu0 %940, %v861
        %v942 = vpop.permute.xlu0 %941
        %944 = vset.pattern.permute.xlu0 1
        %945 = vperm.xlu0 %944, %v862
        %v946 = vpop.permute.xlu0 %945
        %948 = vset.pattern.permute.xlu0 1
        %949 = vperm.xlu0 %948, %v863
        %v950 = vpop.permute.xlu0 %949
        %v952 = vmul.f32 %v443, %v922
        %v953 = vmul.f32 %v444, %v922
        %v954 = vmul.f32 %v445, %v926
        %v955 = vmul.f32 %v446, %v926
        %v956 = vmul.f32 %v447, %v930
        %v957 = vmul.f32 %v448, %v930
        %v958 = vmul.f32 %v449, %v934
        %v959 = vmul.f32 %v450, %v934
        %v960 = vmul.f32 %v451, %v938
        %v961 = vmul.f32 %v452, %v938
        %v962 = vmul.f32 %v453, %v942
        %v963 = vmul.f32 %v454, %v942
        %v964 = vmul.f32 %v455, %v946
        %v965 = vmul.f32 %v456, %v946
        %v966 = vmul.f32 %v457, %v950
        %v967 = vmul.f32 %v458, %v950
        %969 = vset.pattern.permute.xlu0 0
        %970 = vperm.xlu0 %969, %v912
        %v971 = vpop.permute.xlu0 %970
        %974 = vset.pattern.permute.xlu0 0
        %975 = vperm.xlu0 %974, %v913
        %v976 = vpop.permute.xlu0 %975
        %979 = vset.pattern.permute.xlu0 0
        %980 = vperm.xlu0 %979, %v914
        %v981 = vpop.permute.xlu0 %980
        %984 = vset.pattern.permute.xlu0 0
        %985 = vperm.xlu0 %984, %v915
        %v986 = vpop.permute.xlu0 %985
        %989 = vset.pattern.permute.xlu0 0
        %990 = vperm.xlu0 %989, %v916
        %v991 = vpop.permute.xlu0 %990
        %994 = vset.pattern.permute.xlu0 0
        %995 = vperm.xlu0 %994, %v917
        %v996 = vpop.permute.xlu0 %995
        %999 = vset.pattern.permute.xlu0 0
        %1000 = vperm.xlu0 %999, %v918
        %v1001 = vpop.permute.xlu0 %1000
        %1004 = vset.pattern.permute.xlu0 0
        %1005 = vperm.xlu0 %1004, %v919
        %v1006 = vpop.permute.xlu0 %1005
        %v1008 = vadd.f32 %v952, %v971
        %v1009 = vadd.f32 %v953, %v971
        %v1010 = vadd.f32 %v954, %v976
        %v1011 = vadd.f32 %v955, %v976
        %v1012 = vadd.f32 %v956, %v981
        %v1013 = vadd.f32 %v957, %v981
        %v1014 = vadd.f32 %v958, %v986
        %v1015 = vadd.f32 %v959, %v986
        %v1016 = vadd.f32 %v960, %v991
        %v1017 = vadd.f32 %v961, %v991
        %v1018 = vadd.f32 %v962, %v996
        %v1019 = vadd.f32 %v963, %v996
        %v1020 = vadd.f32 %v964, %v1001
        %v1021 = vadd.f32 %v965, %v1001
        %v1022 = vadd.f32 %v966, %v1006
        %v1023 = vadd.f32 %v967, %v1006
        %v1024 = vpack.c.bf16 %v1010, %v1008
        %v1025 = vpack.c.bf16 %v1011, %v1009
        %v1026 = vpack.c.bf16 %v1014, %v1012
        %v1027 = vpack.c.bf16 %v1015, %v1013
        %v1028 = vpack.c.bf16 %v1018, %v1016
        %v1029 = vpack.c.bf16 %v1019, %v1017
        %v1030 = vpack.c.bf16 %v1022, %v1020
        %v1031 = vpack.c.bf16 %v1023, %v1021
        %1032 = vxpose.xlu0.c.b16.start [1/8] %v1024, 128
        %1033 = vxpose.xlu0.c.b16.cont [2/8] %v1026, 128
        %1034 = vxpose.xlu0.c.b16.cont [3/8] %v1028, 128
        %1035 = vxpose.xlu0.c.b16.cont [4/8] %v1030, 128
        %1036 = vxpose.xlu0.c.b16.cont [5/8] 0, 128
        %1037 = vxpose.xlu0.c.b16.cont [6/8] 0, 128
        %1038 = vxpose.xlu0.c.b16.cont [7/8] 0, 128
        %1039 = vxpose.xlu0.c.b16.end [8/8] 0, 128
        %v1040 = vpop.trf.xlu0
        %v1041 = vpop.trf.xlu0
        %v1042 = vpop.trf.xlu0
        %v1043 = vpop.trf.xlu0
        %v1044 = vpop.trf.xlu0
        %v1045 = vpop.trf.xlu0
        %v1046 = vpop.trf.xlu0
        %v1047 = vpop.trf.xlu0
        %1048 = vxpose.xlu0.c.b16.start [1/8] %v1025, 128
        %1049 = vxpose.xlu0.c.b16.cont [2/8] %v1027, 128
        %1050 = vxpose.xlu0.c.b16.cont [3/8] %v1029, 128
        %1051 = vxpose.xlu0.c.b16.cont [4/8] %v1031, 128
        %1052 = vxpose.xlu0.c.b16.cont [5/8] 0, 128
        %1053 = vxpose.xlu0.c.b16.cont [6/8] 0, 128
        %1054 = vxpose.xlu0.c.b16.cont [7/8] 0, 128
        %1055 = vxpose.xlu0.c.b16.end [8/8] 0, 128
        %v1056 = vpop.trf.xlu0
        %v1057 = vpop.trf.xlu0
        %v1058 = vpop.trf.xlu0
        %v1059 = vpop.trf.xlu0
        %v1060 = vpop.trf.xlu0
        %v1061 = vpop.trf.xlu0
        %v1062 = vpop.trf.xlu0
        %v1063 = vpop.trf.xlu0
        %v1064 = vld [vmem:[#allocation5] sm:$0xf]
        %v1065 = vld [vmem:[#allocation5 + $0x4] sm:$0xf]
        %v1066 = vld [vmem:[#allocation5 + $0x8] sm:$0xf]
        %v1067 = vld [vmem:[#allocation5 + $0xc] sm:$0xf]
        %v1068 = vld [vmem:[#allocation5 + $0x10] sm:$0xf]
        %v1069 = vld [vmem:[#allocation5 + $0x14] sm:$0xf]
        %v1070 = vld [vmem:[#allocation5 + $0x18] sm:$0xf]
        %v1071 = vld [vmem:[#allocation5 + $0x1c] sm:$0xf]
        %v1072 = vld [vmem:[#allocation7] sm:$0x1]
        %v1074 = vlaneseq
        %v1075 = vshrl.u32 %v1074, 7
        %v1076 = vsub.s32 0, %v1075
        %v1077 = vrot.slane %v1072, %v1076
        %v1087 = vunpack.c.l.b16 %v1064
        %v1088 = vunpack.c.l.b16 %v1065
        %v1089 = vunpack.c.l.b16 %v1066
        %v1090 = vunpack.c.l.b16 %v1067
        %v1091 = vunpack.c.l.b16 %v1068
        %v1092 = vunpack.c.l.b16 %v1069
        %v1093 = vunpack.c.l.b16 %v1070
        %v1094 = vunpack.c.l.b16 %v1071
        %v1095 = vpack.c.b16 %v1088, %v1087
        %v1096 = vpack.c.b16 %v1090, %v1089
        %v1097 = vpack.c.b16 %v1092, %v1091
        %v1098 = vpack.c.b16 %v1094, %v1093
        %v1104 = vsel %vm536, %v1040, 0
        %v1107 = vsel %vm536, %v1041, 0
        %v1110 = vsel %vm536, %v1042, 0
        %v1113 = vsel %vm536, %v1043, 0
        %v1116 = vsel %vm536, %v1044, 0
        %v1119 = vsel %vm536, %v1045, 0
        %v1122 = vsel %vm536, %v1046, 0
        %v1125 = vsel %vm536, %v1047, 0
        %v1128 = vsel %vm536, %v1056, 0
        %v1131 = vsel %vm536, %v1057, 0
        %v1134 = vsel %vm536, %v1058, 0
        %v1137 = vsel %vm536, %v1059, 0
        %v1140 = vsel %vm536, %v1060, 0
        %v1143 = vsel %vm536, %v1061, 0
        %v1146 = vsel %vm536, %v1062, 0
        %v1149 = vsel %vm536, %v1063, 0
        %1151 = vmatprep.subr.bf16.mxu0 0
        %1152 = vmatpush1.bf16.msra.mxu0 %v1095
        %1153 = vmatprep.subr.bf16.mxu0 0
        %1154 = vmatpush1.bf16.msra.mxu0 %v1096
        %1155 = vmatprep.subr.bf16.mxu0 0
        %1156 = vmatpush1.bf16.msra.mxu0 %v1097
        %1157 = vmatprep.subr.bf16.mxu0 0
        %1158 = vmatpush1.bf16.msra.mxu0 %v1098
        %1159 = vmatprep.subr.bf16.mxu0 0
        %1160 = vmatpush1.bf16.msra.mxu0 0
        %1161 = vmatprep.subr.bf16.mxu0 0
        %1162 = vmatpush1.bf16.msra.mxu0 0
        %1163 = vmatprep.subr.bf16.mxu0 0
        %1164 = vmatpush1.bf16.msra.mxu0 0
        %1165 = vmatprep.subr.bf16.mxu0 0
        %1166 = vmatpush1.bf16.msra.mxu0 0
        %1167 = vmatprep.subr.bf16.mxu0 0
        %1168 = vmatpush1.bf16.msra.mxu0 0
        %1169 = vmatprep.subr.bf16.mxu0 0
        %1170 = vmatpush1.bf16.msra.mxu0 0
        %1171 = vmatprep.subr.bf16.mxu0 0
        %1172 = vmatpush1.bf16.msra.mxu0 0
        %1173 = vmatprep.subr.bf16.mxu0 0
        %1174 = vmatpush1.bf16.msra.mxu0 0
        %1175 = vmatprep.subr.bf16.mxu0 0
        %1176 = vmatpush1.bf16.msra.mxu0 0
        %1177 = vmatprep.subr.bf16.mxu0 0
        %1178 = vmatpush1.bf16.msra.mxu0 0
        %1179 = vmatprep.subr.bf16.mxu0 0
        %1180 = vmatpush1.bf16.msra.mxu0 0
        %1181 = vmatprep.subr.bf16.mxu0 0
        %1182 = vmatpush1.bf16.msra.mxu0 0
        %1183 = vmatprep.mubr.bf16.mxu0 0
        %1184 = vmatmul.mubr.bf16.gmra.mrb[0].mxu0 %v1104
        %v1185 = vpop.f32.mrb[0].mxu0
        %v1186 = vadd.f32 %v1077, %v1185
        %v1187 = vpop.f32.mrb[0].mxu0
        %v1188 = vpop.f32.mrb[0].mxu0
        %v1189 = vadd.f32 %v1077, %v1188
        %v1190 = vpop.f32.mrb[0].mxu0
        %1191 = vmatprep.mubr.bf16.mxu0 0
        %1192 = vmatmul.mubr.bf16.gmra.mrb[0].mxu0 %v1107
        %v1193 = vpop.f32.mrb[0].mxu0
        %v1194 = vadd.f32 %v1077, %v1193
        %v1195 = vpop.f32.mrb[0].mxu0
        %v1196 = vpop.f32.mrb[0].mxu0
        %v1197 = vadd.f32 %v1077, %v1196
        %v1198 = vpop.f32.mrb[0].mxu0
        %1199 = vmatprep.mubr.bf16.mxu0 0
        %1200 = vmatmul.mubr.bf16.gmra.mrb[0].mxu0 %v1110
        %v1201 = vpop.f32.mrb[0].mxu0
        %v1202 = vadd.f32 %v1077, %v1201
        %v1203 = vpop.f32.mrb[0].mxu0
        %v1204 = vpop.f32.mrb[0].mxu0
        %v1205 = vadd.f32 %v1077, %v1204
        %v1206 = vpop.f32.mrb[0].mxu0
        %1207 = vmatprep.mubr.bf16.mxu0 0
        %1208 = vmatmul.mubr.bf16.gmra.mrb[0].mxu0 %v1113
        %v1209 = vpop.f32.mrb[0].mxu0
        %v1210 = vadd.f32 %v1077, %v1209
        %v1211 = vpop.f32.mrb[0].mxu0
        %v1212 = vpop.f32.mrb[0].mxu0
        %v1213 = vadd.f32 %v1077, %v1212
        %v1214 = vpop.f32.mrb[0].mxu0
        %1215 = vmatprep.mubr.bf16.mxu0 0
        %1216 = vmatmul.mubr.bf16.gmra.mrb[0].mxu0 %v1116
        %v1217 = vpop.f32.mrb[0].mxu0
        %v1218 = vadd.f32 %v1077, %v1217
        %v1219 = vpop.f32.mrb[0].mxu0
        %v1220 = vpop.f32.mrb[0].mxu0
        %v1221 = vadd.f32 %v1077, %v1220
        %v1222 = vpop.f32.mrb[0].mxu0
        %1223 = vmatprep.mubr.bf16.mxu0 0
        %1224 = vmatmul.mubr.bf16.gmra.mrb[0].mxu0 %v1119
        %v1225 = vpop.f32.mrb[0].mxu0
        %v1226 = vadd.f32 %v1077, %v1225
        %v1227 = vpop.f32.mrb[0].mxu0
        %v1228 = vpop.f32.mrb[0].mxu0
        %v1229 = vadd.f32 %v1077, %v1228
        %v1230 = vpop.f32.mrb[0].mxu0
        %1231 = vmatprep.mubr.bf16.mxu0 0
        %1232 = vmatmul.mubr.bf16.gmra.mrb[0].mxu0 %v1122
        %v1233 = vpop.f32.mrb[0].mxu0
        %v1234 = vadd.f32 %v1077, %v1233
        %v1235 = vpop.f32.mrb[0].mxu0
        %v1236 = vpop.f32.mrb[0].mxu0
        %v1237 = vadd.f32 %v1077, %v1236
        %v1238 = vpop.f32.mrb[0].mxu0
        %1239 = vmatprep.mubr.bf16.mxu0 0
        %1240 = vmatmul.mubr.bf16.gmra.mrb[0].mxu0 %v1125
        %v1241 = vpop.f32.mrb[0].mxu0
        %v1242 = vadd.f32 %v1077, %v1241
        %v1243 = vpop.f32.mrb[0].mxu0
        %v1244 = vpop.f32.mrb[0].mxu0
        %v1245 = vadd.f32 %v1077, %v1244
        %v1246 = vpop.f32.mrb[0].mxu0
        %1247 = vmatprep.mubr.bf16.mxu0 0
        %1248 = vmatmul.mubr.bf16.gmra.mrb[0].mxu0 %v1128
        %v1249 = vpop.f32.mrb[0].mxu0
        %v1250 = vadd.f32 %v1077, %v1249
        %v1251 = vpop.f32.mrb[0].mxu0
        %v1252 = vpop.f32.mrb[0].mxu0
        %v1253 = vadd.f32 %v1077, %v1252
        %v1254 = vpop.f32.mrb[0].mxu0
        %1255 = vmatprep.mubr.bf16.mxu0 0
        %1256 = vmatmul.mubr.bf16.gmra.mrb[0].mxu0 %v1131
        %v1257 = vpop.f32.mrb[0].mxu0
        %v1258 = vadd.f32 %v1077, %v1257
        %v1259 = vpop.f32.mrb[0].mxu0
        %v1260 = vpop.f32.mrb[0].mxu0
        %v1261 = vadd.f32 %v1077, %v1260
        %v1262 = vpop.f32.mrb[0].mxu0
        %1263 = vmatprep.mubr.bf16.mxu0 0
        %1264 = vmatmul.mubr.bf16.gmra.mrb[0].mxu0 %v1134
        %v1265 = vpop.f32.mrb[0].mxu0
        %v1266 = vadd.f32 %v1077, %v1265
        %v1267 = vpop.f32.mrb[0].mxu0
        %v1268 = vpop.f32.mrb[0].mxu0
        %v1269 = vadd.f32 %v1077, %v1268
        %v1270 = vpop.f32.mrb[0].mxu0
        %1271 = vmatprep.mubr.bf16.mxu0 0
        %1272 = vmatmul.mubr.bf16.gmra.mrb[0].mxu0 %v1137
        %v1273 = vpop.f32.mrb[0].mxu0
        %v1274 = vadd.f32 %v1077, %v1273
        %v1275 = vpop.f32.mrb[0].mxu0
        %v1276 = vpop.f32.mrb[0].mxu0
        %v1277 = vadd.f32 %v1077, %v1276
        %v1278 = vpop.f32.mrb[0].mxu0
        %1279 = vmatprep.mubr.bf16.mxu0 0
        %1280 = vmatmul.mubr.bf16.gmra.mrb[0].mxu0 %v1140
        %v1281 = vpop.f32.mrb[0].mxu0
        %v1282 = vadd.f32 %v1077, %v1281
        %v1283 = vpop.f32.mrb[0].mxu0
        %v1284 = vpop.f32.mrb[0].mxu0
        %v1285 = vadd.f32 %v1077, %v1284
        %v1286 = vpop.f32.mrb[0].mxu0
        %1287 = vmatprep.mubr.bf16.mxu0 0
        %1288 = vmatmul.mubr.bf16.gmra.mrb[0].mxu0 %v1143
        %v1289 = vpop.f32.mrb[0].mxu0
        %v1290 = vadd.f32 %v1077, %v1289
        %v1291 = vpop.f32.mrb[0].mxu0
        %v1292 = vpop.f32.mrb[0].mxu0
        %v1293 = vadd.f32 %v1077, %v1292
        %v1294 = vpop.f32.mrb[0].mxu0
        %1295 = vmatprep.mubr.bf16.mxu0 0
        %1296 = vmatmul.mubr.bf16.gmra.mrb[0].mxu0 %v1146
        %v1297 = vpop.f32.mrb[0].mxu0
        %v1298 = vadd.f32 %v1077, %v1297
        %v1299 = vpop.f32.mrb[0].mxu0
        %v1300 = vpop.f32.mrb[0].mxu0
        %v1301 = vadd.f32 %v1077, %v1300
        %v1302 = vpop.f32.mrb[0].mxu0
        %1303 = vmatprep.mubr.bf16.mxu0 0
        %1304 = vmatmul.mubr.bf16.gmra.mrb[0].mxu0 %v1149
        %v1305 = vpop.f32.mrb[0].mxu0
        %v1306 = vadd.f32 %v1077, %v1305
        %v1307 = vpop.f32.mrb[0].mxu0
        %v1308 = vpop.f32.mrb[0].mxu0
        %v1309 = vadd.f32 %v1077, %v1308
        %v1310 = vpop.f32.mrb[0].mxu0
        %1311 = vdwg.mxu0
        %v1312 = vld [vmem:[#allocation8] sm:$0xf]
        %v1313 = vld [vmem:[#allocation8 + $0x4] sm:$0xf]
        %v1314 = vld [vmem:[#allocation8 + $0x8] sm:$0xf]
        %v1315 = vld [vmem:[#allocation8 + $0xc] sm:$0xf]
        %v1316 = vld [vmem:[#allocation8 + $0x10] sm:$0xf]
        %v1317 = vld [vmem:[#allocation8 + $0x14] sm:$0xf]
        %v1318 = vld [vmem:[#allocation8 + $0x18] sm:$0xf]
        %v1319 = vld [vmem:[#allocation8 + $0x1c] sm:$0xf]
        %v1320 = vld [vmem:[%s8] sm:$0xff]
        %v1321 = vld [vmem:[%s8 + $0x8] sm:$0xff]
        %v1322 = vld [vmem:[%s8 + $0x10] sm:$0xff]
        %v1323 = vld [vmem:[%s8 + $0x18] sm:$0xff]
        %v1324 = vld [vmem:[%s8 + $0x20] sm:$0xff]
        %v1325 = vld [vmem:[%s8 + $0x28] sm:$0xff]
        %v1326 = vld [vmem:[%s8 + $0x30] sm:$0xff]
        %v1327 = vld [vmem:[%s8 + $0x38] sm:$0xff]
        %1329 = vset.pattern.permute.xlu0 0
        %1330 = vperm.xlu0 %1329, %v1320
        %v1331 = vpop.permute.xlu0 %1330
        %1334 = vset.pattern.permute.xlu0 0
        %1335 = vperm.xlu0 %1334, %v1321
        %v1336 = vpop.permute.xlu0 %1335
        %1339 = vset.pattern.permute.xlu0 0
        %1340 = vperm.xlu0 %1339, %v1322
        %v1341 = vpop.permute.xlu0 %1340
        %1344 = vset.pattern.permute.xlu0 0
        %1345 = vperm.xlu0 %1344, %v1323
        %v1346 = vpop.permute.xlu0 %1345
        %1349 = vset.pattern.permute.xlu0 0
        %1350 = vperm.xlu0 %1349, %v1324
        %v1351 = vpop.permute.xlu0 %1350
        %1354 = vset.pattern.permute.xlu0 0
        %1355 = vperm.xlu0 %1354, %v1325
        %v1356 = vpop.permute.xlu0 %1355
        %1359 = vset.pattern.permute.xlu0 0
        %1360 = vperm.xlu0 %1359, %v1326
        %v1361 = vpop.permute.xlu0 %1360
        %1364 = vset.pattern.permute.xlu0 0
        %1365 = vperm.xlu0 %1364, %v1327
        %v1366 = vpop.permute.xlu0 %1365
        %v1376 = vunpack.c.l.b16 %v1312
        %v1377 = vunpack.c.l.b16 %v1313
        %v1378 = vunpack.c.l.b16 %v1314
        %v1379 = vunpack.c.l.b16 %v1315
        %v1380 = vunpack.c.l.b16 %v1316
        %v1381 = vunpack.c.l.b16 %v1317
        %v1382 = vunpack.c.l.b16 %v1318
        %v1383 = vunpack.c.l.b16 %v1319
        %v1384 = vpack.c.b16 %v1377, %v1376
        %v1385 = vpack.c.b16 %v1379, %v1378
        %v1386 = vpack.c.b16 %v1381, %v1380
        %v1387 = vpack.c.b16 %v1383, %v1382
        %v1389 = vsel %vm536, %v1384, 0
        %v1392 = vsel %vm536, %v1385, 0
        %v1395 = vsel %vm536, %v1386, 0
        %v1398 = vsel %vm536, %v1387, 0
        %1400 = vmatprep.subr.bf16.mxu0 %v1025
        %1401 = vmatpush1.bf16.msra.mxu0 %v1024
        %1402 = vmatprep.subr.bf16.mxu0 %v1027
        %1403 = vmatpush1.bf16.msra.mxu0 %v1026
        %1404 = vmatprep.subr.bf16.mxu0 %v1029
        %1405 = vmatpush1.bf16.msra.mxu0 %v1028
        %1406 = vmatprep.subr.bf16.mxu0 %v1031
        %1407 = vmatpush1.bf16.msra.mxu0 %v1030
        %1408 = vmatprep.subr.bf16.mxu0 0
        %1409 = vmatpush1.bf16.msra.mxu0 0
        %1410 = vmatprep.subr.bf16.mxu0 0
        %1411 = vmatpush1.bf16.msra.mxu0 0
        %1412 = vmatprep.subr.bf16.mxu0 0
        %1413 = vmatpush1.bf16.msra.mxu0 0
        %1414 = vmatprep.subr.bf16.mxu0 0
        %1415 = vmatpush1.bf16.msra.mxu0 0
        %1416 = vmatprep.subr.bf16.mxu0 0
        %1417 = vmatpush1.bf16.msra.mxu0 0
        %1418 = vmatprep.subr.bf16.mxu0 0
        %1419 = vmatpush1.bf16.msra.mxu0 0
        %1420 = vmatprep.subr.bf16.mxu0 0
        %1421 = vmatpush1.bf16.msra.mxu0 0
        %1422 = vmatprep.subr.bf16.mxu0 0
        %1423 = vmatpush1.bf16.msra.mxu0 0
        %1424 = vmatprep.subr.bf16.mxu0 0
        %1425 = vmatpush1.bf16.msra.mxu0 0
        %1426 = vmatprep.subr.bf16.mxu0 0
        %1427 = vmatpush1.bf16.msra.mxu0 0
        %1428 = vmatprep.subr.bf16.mxu0 0
        %1429 = vmatpush1.bf16.msra.mxu0 0
        %1430 = vmatprep.subr.bf16.mxu0 0
        %1431 = vmatpush1.bf16.msra.mxu0 0
        %1432 = vmatprep.mubr.bf16.mxu0 0
        %1433 = vmatmul.mubr.bf16.gmra.mrb[0].mxu0 %v1389
        %v1434 = vpop.f32.mrb[0].mxu0
        %v1435 = vadd.f32 %v1331, %v1434
        %v1436 = vpop.f32.mrb[0].mxu0
        %v1437 = vadd.f32 %v1331, %v1436
        %v1438 = vpop.f32.mrb[0].mxu0
        %v1439 = vadd.f32 %v1336, %v1438
        %v1440 = vpop.f32.mrb[0].mxu0
        %v1441 = vadd.f32 %v1336, %v1440
        %1442 = vmatprep.mubr.bf16.mxu0 0
        %1443 = vmatmul.mubr.bf16.gmra.mrb[0].mxu0 %v1392
        %v1444 = vpop.f32.mrb[0].mxu0
        %v1445 = vadd.f32 %v1341, %v1444
        %v1446 = vpop.f32.mrb[0].mxu0
        %v1447 = vadd.f32 %v1341, %v1446
        %v1448 = vpop.f32.mrb[0].mxu0
        %v1449 = vadd.f32 %v1346, %v1448
        %v1450 = vpop.f32.mrb[0].mxu0
        %v1451 = vadd.f32 %v1346, %v1450
        %1452 = vmatprep.mubr.bf16.mxu0 0
        %1453 = vmatmul.mubr.bf16.gmra.mrb[0].mxu0 %v1395
        %v1454 = vpop.f32.mrb[0].mxu0
        %v1455 = vadd.f32 %v1351, %v1454
        %v1456 = vpop.f32.mrb[0].mxu0
        %v1457 = vadd.f32 %v1351, %v1456
        %v1458 = vpop.f32.mrb[0].mxu0
        %v1459 = vadd.f32 %v1356, %v1458
        %v1460 = vpop.f32.mrb[0].mxu0
        %v1461 = vadd.f32 %v1356, %v1460
        %1462 = vmatprep.mubr.bf16.mxu0 0
        %1463 = vmatmul.mubr.bf16.gmra.mrb[0].mxu0 %v1398
        %v1464 = vpop.f32.mrb[0].mxu0
        %v1465 = vadd.f32 %v1361, %v1464
        %v1466 = vpop.f32.mrb[0].mxu0
        %v1467 = vadd.f32 %v1361, %v1466
        %v1468 = vpop.f32.mrb[0].mxu0
        %v1469 = vadd.f32 %v1366, %v1468
        %v1470 = vpop.f32.mrb[0].mxu0
        %v1471 = vadd.f32 %v1366, %v1470
        %1472 = vdwg.mxu0
        %v1473 = vpack.c.bf16 %v1189, %v1186
        %v1474 = vpack.c.bf16 %v1197, %v1194
        %v1475 = vpack.c.bf16 %v1205, %v1202
        %v1476 = vpack.c.bf16 %v1213, %v1210
        %v1477 = vpack.c.bf16 %v1221, %v1218
        %v1478 = vpack.c.bf16 %v1229, %v1226
        %v1479 = vpack.c.bf16 %v1237, %v1234
        %v1480 = vpack.c.bf16 %v1245, %v1242
        %v1481 = vpack.c.bf16 %v1253, %v1250
        %v1482 = vpack.c.bf16 %v1261, %v1258
        %v1483 = vpack.c.bf16 %v1269, %v1266
        %v1484 = vpack.c.bf16 %v1277, %v1274
        %v1485 = vpack.c.bf16 %v1285, %v1282
        %v1486 = vpack.c.bf16 %v1293, %v1290
        %v1487 = vpack.c.bf16 %v1301, %v1298
        %v1488 = vpack.c.bf16 %v1309, %v1306
        %v1489 = vpack.c.bf16 %v1439, %v1435
        %v1490 = vpack.c.bf16 %v1441, %v1437
        %v1491 = vpack.c.bf16 %v1449, %v1445
        %v1492 = vpack.c.bf16 %v1451, %v1447
        %v1493 = vpack.c.bf16 %v1459, %v1455
        %v1494 = vpack.c.bf16 %v1461, %v1457
        %v1495 = vpack.c.bf16 %v1469, %v1465
        %v1496 = vpack.c.bf16 %v1471, %v1467
        %v1498 = vsel %vm536, %v1473, 0
        %v1501 = vsel %vm536, %v1474, 0
        %v1504 = vsel %vm536, %v1475, 0
        %v1507 = vsel %vm536, %v1476, 0
        %v1510 = vsel %vm536, %v1477, 0
        %v1513 = vsel %vm536, %v1478, 0
        %v1516 = vsel %vm536, %v1479, 0
        %v1519 = vsel %vm536, %v1480, 0
        %v1522 = vsel %vm536, %v1481, 0
        %v1525 = vsel %vm536, %v1482, 0
        %v1528 = vsel %vm536, %v1483, 0
        %v1531 = vsel %vm536, %v1484, 0
        %v1534 = vsel %vm536, %v1485, 0
        %v1537 = vsel %vm536, %v1486, 0
        %v1540 = vsel %vm536, %v1487, 0
        %v1543 = vsel %vm536, %v1488, 0
        %1545 = vmatprep.subr.bf16.mxu0 %v1490
        %1546 = vmatpush1.bf16.msra.mxu0 %v1489
        %1547 = vmatprep.subr.bf16.mxu0 %v1492
        %1548 = vmatpush1.bf16.msra.mxu0 %v1491
        %1549 = vmatprep.subr.bf16.mxu0 %v1494
        %1550 = vmatpush1.bf16.msra.mxu0 %v1493
        %1551 = vmatprep.subr.bf16.mxu0 %v1496
        %1552 = vmatpush1.bf16.msra.mxu0 %v1495
        %1553 = vmatprep.subr.bf16.mxu0 0
        %1554 = vmatpush1.bf16.msra.mxu0 0
        %1555 = vmatprep.subr.bf16.mxu0 0
        %1556 = vmatpush1.bf16.msra.mxu0 0
        %1557 = vmatprep.subr.bf16.mxu0 0
        %1558 = vmatpush1.bf16.msra.mxu0 0
        %1559 = vmatprep.subr.bf16.mxu0 0
        %1560 = vmatpush1.bf16.msra.mxu0 0
        %1561 = vmatprep.subr.bf16.mxu0 0
        %1562 = vmatpush1.bf16.msra.mxu0 0
        %1563 = vmatprep.subr.bf16.mxu0 0
        %1564 = vmatpush1.bf16.msra.mxu0 0
        %1565 = vmatprep.subr.bf16.mxu0 0
        %1566 = vmatpush1.bf16.msra.mxu0 0
        %1567 = vmatprep.subr.bf16.mxu0 0
        %1568 = vmatpush1.bf16.msra.mxu0 0
        %1569 = vmatprep.subr.bf16.mxu0 0
        %1570 = vmatpush1.bf16.msra.mxu0 0
        %1571 = vmatprep.subr.bf16.mxu0 0
        %1572 = vmatpush1.bf16.msra.mxu0 0
        %1573 = vmatprep.subr.bf16.mxu0 0
        %1574 = vmatpush1.bf16.msra.mxu0 0
        %1575 = vmatprep.subr.bf16.mxu0 0
        %1576 = vmatpush1.bf16.msra.mxu0 0
        %1577 = vmatprep.mubr.bf16.mxu0 0
        %1578 = vmatmul.mubr.bf16.gmra.mrb[0].mxu0 %v1498
        %v1579 = vpop.f32.mrb[0].mxu0
        %v1580 = vadd.f32 0.0, %v1579
        %v1581 = vpop.f32.mrb[0].mxu0
        %v1582 = vadd.f32 0.0, %v1581
        %v1583 = vpop.f32.mrb[0].mxu0
        %v1584 = vadd.f32 0.0, %v1583
        %v1585 = vpop.f32.mrb[0].mxu0
        %v1586 = vadd.f32 0.0, %v1585
        %1587 = vmatprep.mubr.bf16.mxu0 0
        %1588 = vmatmul.mubr.bf16.gmra.mrb[0].mxu0 %v1501
        %v1589 = vpop.f32.mrb[0].mxu0
        %v1590 = vadd.f32 0.0, %v1589
        %v1591 = vpop.f32.mrb[0].mxu0
        %v1592 = vadd.f32 0.0, %v1591
        %v1593 = vpop.f32.mrb[0].mxu0
        %v1594 = vadd.f32 0.0, %v1593
        %v1595 = vpop.f32.mrb[0].mxu0
        %v1596 = vadd.f32 0.0, %v1595
        %1597 = vmatprep.mubr.bf16.mxu0 0
        %1598 = vmatmul.mubr.bf16.gmra.mrb[0].mxu0 %v1504
        %v1599 = vpop.f32.mrb[0].mxu0
        %v1600 = vadd.f32 0.0, %v1599
        %v1601 = vpop.f32.mrb[0].mxu0
        %v1602 = vadd.f32 0.0, %v1601
        %v1603 = vpop.f32.mrb[0].mxu0
        %v1604 = vadd.f32 0.0, %v1603
        %v1605 = vpop.f32.mrb[0].mxu0
        %v1606 = vadd.f32 0.0, %v1605
        %1607 = vmatprep.mubr.bf16.mxu0 0
        %1608 = vmatmul.mubr.bf16.gmra.mrb[0].mxu0 %v1507
        %v1609 = vpop.f32.mrb[0].mxu0
        %v1610 = vadd.f32 0.0, %v1609
        %v1611 = vpop.f32.mrb[0].mxu0
        %v1612 = vadd.f32 0.0, %v1611
        %v1613 = vpop.f32.mrb[0].mxu0
        %v1614 = vadd.f32 0.0, %v1613
        %v1615 = vpop.f32.mrb[0].mxu0
        %v1616 = vadd.f32 0.0, %v1615
        %1617 = vmatprep.mubr.bf16.mxu0 0
        %1618 = vmatmul.mubr.bf16.gmra.mrb[0].mxu0 %v1510
        %v1619 = vpop.f32.mrb[0].mxu0
        %v1620 = vadd.f32 0.0, %v1619
        %v1621 = vpop.f32.mrb[0].mxu0
        %v1622 = vadd.f32 0.0, %v1621
        %v1623 = vpop.f32.mrb[0].mxu0
        %v1624 = vadd.f32 0.0, %v1623
        %v1625 = vpop.f32.mrb[0].mxu0
        %v1626 = vadd.f32 0.0, %v1625
        %1627 = vmatprep.mubr.bf16.mxu0 0
        %1628 = vmatmul.mubr.bf16.gmra.mrb[0].mxu0 %v1513
        %v1629 = vpop.f32.mrb[0].mxu0
        %v1630 = vadd.f32 0.0, %v1629
        %v1631 = vpop.f32.mrb[0].mxu0
        %v1632 = vadd.f32 0.0, %v1631
        %v1633 = vpop.f32.mrb[0].mxu0
        %v1634 = vadd.f32 0.0, %v1633
        %v1635 = vpop.f32.mrb[0].mxu0
        %v1636 = vadd.f32 0.0, %v1635
        %1637 = vmatprep.mubr.bf16.mxu0 0
        %1638 = vmatmul.mubr.bf16.gmra.mrb[0].mxu0 %v1516
        %v1639 = vpop.f32.mrb[0].mxu0
        %v1640 = vadd.f32 0.0, %v1639
        %v1641 = vpop.f32.mrb[0].mxu0
        %v1642 = vadd.f32 0.0, %v1641
        %v1643 = vpop.f32.mrb[0].mxu0
        %v1644 = vadd.f32 0.0, %v1643
        %v1645 = vpop.f32.mrb[0].mxu0
        %v1646 = vadd.f32 0.0, %v1645
        %1647 = vmatprep.mubr.bf16.mxu0 0
        %1648 = vmatmul.mubr.bf16.gmra.mrb[0].mxu0 %v1519
        %v1649 = vpop.f32.mrb[0].mxu0
        %v1650 = vadd.f32 0.0, %v1649
        %v1651 = vpop.f32.mrb[0].mxu0
        %v1652 = vadd.f32 0.0, %v1651
        %v1653 = vpop.f32.mrb[0].mxu0
        %v1654 = vadd.f32 0.0, %v1653
        %v1655 = vpop.f32.mrb[0].mxu0
        %v1656 = vadd.f32 0.0, %v1655
        %1657 = vmatprep.mubr.bf16.mxu0 0
        %1658 = vmatmul.mubr.bf16.gmra.mrb[0].mxu0 %v1522
        %v1659 = vpop.f32.mrb[0].mxu0
        %v1660 = vadd.f32 0.0, %v1659
        %v1661 = vpop.f32.mrb[0].mxu0
        %v1662 = vadd.f32 0.0, %v1661
        %v1663 = vpop.f32.mrb[0].mxu0
        %v1664 = vadd.f32 0.0, %v1663
        %v1665 = vpop.f32.mrb[0].mxu0
        %v1666 = vadd.f32 0.0, %v1665
        %1667 = vmatprep.mubr.bf16.mxu0 0
        %1668 = vmatmul.mubr.bf16.gmra.mrb[0].mxu0 %v1525
        %v1669 = vpop.f32.mrb[0].mxu0
        %v1670 = vadd.f32 0.0, %v1669
        %v1671 = vpop.f32.mrb[0].mxu0
        %v1672 = vadd.f32 0.0, %v1671
        %v1673 = vpop.f32.mrb[0].mxu0
        %v1674 = vadd.f32 0.0, %v1673
        %v1675 = vpop.f32.mrb[0].mxu0
        %v1676 = vadd.f32 0.0, %v1675
        %1677 = vmatprep.mubr.bf16.mxu0 0
        %1678 = vmatmul.mubr.bf16.gmra.mrb[0].mxu0 %v1528
        %v1679 = vpop.f32.mrb[0].mxu0
        %v1680 = vadd.f32 0.0, %v1679
        %v1681 = vpop.f32.mrb[0].mxu0
        %v1682 = vadd.f32 0.0, %v1681
        %v1683 = vpop.f32.mrb[0].mxu0
        %v1684 = vadd.f32 0.0, %v1683
        %v1685 = vpop.f32.mrb[0].mxu0
        %v1686 = vadd.f32 0.0, %v1685
        %1687 = vmatprep.mubr.bf16.mxu0 0
        %1688 = vmatmul.mubr.bf16.gmra.mrb[0].mxu0 %v1531
        %v1689 = vpop.f32.mrb[0].mxu0
        %v1690 = vadd.f32 0.0, %v1689
        %v1691 = vpop.f32.mrb[0].mxu0
        %v1692 = vadd.f32 0.0, %v1691
        %v1693 = vpop.f32.mrb[0].mxu0
        %v1694 = vadd.f32 0.0, %v1693
        %v1695 = vpop.f32.mrb[0].mxu0
        %v1696 = vadd.f32 0.0, %v1695
        %1697 = vmatprep.mubr.bf16.mxu0 0
        %1698 = vmatmul.mubr.bf16.gmra.mrb[0].mxu0 %v1534
        %v1699 = vpop.f32.mrb[0].mxu0
        %v1700 = vadd.f32 0.0, %v1699
        %v1701 = vpop.f32.mrb[0].mxu0
        %v1702 = vadd.f32 0.0, %v1701
        %v1703 = vpop.f32.mrb[0].mxu0
        %v1704 = vadd.f32 0.0, %v1703
        %v1705 = vpop.f32.mrb[0].mxu0
        %v1706 = vadd.f32 0.0, %v1705
        %1707 = vmatprep.mubr.bf16.mxu0 0
        %1708 = vmatmul.mubr.bf16.gmra.mrb[0].mxu0 %v1537
        %v1709 = vpop.f32.mrb[0].mxu0
        %v1710 = vadd.f32 0.0, %v1709
        %v1711 = vpop.f32.mrb[0].mxu0
        %v1712 = vadd.f32 0.0, %v1711
        %v1713 = vpop.f32.mrb[0].mxu0
        %v1714 = vadd.f32 0.0, %v1713
        %v1715 = vpop.f32.mrb[0].mxu0
        %v1716 = vadd.f32 0.0, %v1715
        %1717 = vmatprep.mubr.bf16.mxu0 0
        %1718 = vmatmul.mubr.bf16.gmra.mrb[0].mxu0 %v1540
        %v1719 = vpop.f32.mrb[0].mxu0
        %v1720 = vadd.f32 0.0, %v1719
        %v1721 = vpop.f32.mrb[0].mxu0
        %v1722 = vadd.f32 0.0, %v1721
        %v1723 = vpop.f32.mrb[0].mxu0
        %v1724 = vadd.f32 0.0, %v1723
        %v1725 = vpop.f32.mrb[0].mxu0
        %v1726 = vadd.f32 0.0, %v1725
        %1727 = vmatprep.mubr.bf16.mxu0 0
        %1728 = vmatmul.mubr.bf16.gmra.mrb[0].mxu0 %v1543
        %v1729 = vpop.f32.mrb[0].mxu0
        %v1730 = vadd.f32 0.0, %v1729
        %v1731 = vpop.f32.mrb[0].mxu0
        %v1732 = vadd.f32 0.0, %v1731
        %v1733 = vpop.f32.mrb[0].mxu0
        %v1734 = vadd.f32 0.0, %v1733
        %v1735 = vpop.f32.mrb[0].mxu0
        %v1736 = vadd.f32 0.0, %v1735
        %1737 = vdwg.mxu0
        %v1738 = vmax.f32 %v1580, %v1582
        %1739 = vmax.xlane.f32.xlu0 %v1738
        %v1740 = vpop.xlane.xlu0 %1739
        %v1741 = vmax.f32 %v1584, %v1586
        %1742 = vmax.xlane.f32.xlu0 %v1741
        %v1743 = vpop.xlane.xlu0 %1742
        %v1744 = vmax.f32 %v1590, %v1592
        %1745 = vmax.xlane.f32.xlu0 %v1744
        %v1746 = vpop.xlane.xlu0 %1745
        %v1747 = vmax.f32 %v1594, %v1596
        %1748 = vmax.xlane.f32.xlu0 %v1747
        %v1749 = vpop.xlane.xlu0 %1748
        %v1750 = vmax.f32 %v1600, %v1602
        %1751 = vmax.xlane.f32.xlu0 %v1750
        %v1752 = vpop.xlane.xlu0 %1751
        %v1753 = vmax.f32 %v1604, %v1606
        %1754 = vmax.xlane.f32.xlu0 %v1753
        %v1755 = vpop.xlane.xlu0 %1754
        %v1756 = vmax.f32 %v1610, %v1612
        %1757 = vmax.xlane.f32.xlu0 %v1756
        %v1758 = vpop.xlane.xlu0 %1757
        %v1759 = vmax.f32 %v1614, %v1616
        %1760 = vmax.xlane.f32.xlu0 %v1759
        %v1761 = vpop.xlane.xlu0 %1760
        %v1762 = vmax.f32 %v1620, %v1622
        %1763 = vmax.xlane.f32.xlu0 %v1762
        %v1764 = vpop.xlane.xlu0 %1763
        %v1765 = vmax.f32 %v1624, %v1626
        %1766 = vmax.xlane.f32.xlu0 %v1765
        %v1767 = vpop.xlane.xlu0 %1766
        %v1768 = vmax.f32 %v1630, %v1632
        %1769 = vmax.xlane.f32.xlu0 %v1768
        %v1770 = vpop.xlane.xlu0 %1769
        %v1771 = vmax.f32 %v1634, %v1636
        %1772 = vmax.xlane.f32.xlu0 %v1771
        %v1773 = vpop.xlane.xlu0 %1772
        %v1774 = vmax.f32 %v1640, %v1642
        %1775 = vmax.xlane.f32.xlu0 %v1774
        %v1776 = vpop.xlane.xlu0 %1775
        %v1777 = vmax.f32 %v1644, %v1646
        %1778 = vmax.xlane.f32.xlu0 %v1777
        %v1779 = vpop.xlane.xlu0 %1778
        %v1780 = vmax.f32 %v1650, %v1652
        %1781 = vmax.xlane.f32.xlu0 %v1780
        %v1782 = vpop.xlane.xlu0 %1781
        %v1783 = vmax.f32 %v1654, %v1656
        %1784 = vmax.xlane.f32.xlu0 %v1783
        %v1785 = vpop.xlane.xlu0 %1784
        %v1786 = vmax.f32 %v1660, %v1662
        %1787 = vmax.xlane.f32.xlu0 %v1786
        %v1788 = vpop.xlane.xlu0 %1787
        %v1789 = vmax.f32 %v1664, %v1666
        %1790 = vmax.xlane.f32.xlu0 %v1789
        %v1791 = vpop.xlane.xlu0 %1790
        %v1792 = vmax.f32 %v1670, %v1672
        %1793 = vmax.xlane.f32.xlu0 %v1792
        %v1794 = vpop.xlane.xlu0 %1793
        %v1795 = vmax.f32 %v1674, %v1676
        %1796 = vmax.xlane.f32.xlu0 %v1795
        %v1797 = vpop.xlane.xlu0 %1796
        %v1798 = vmax.f32 %v1680, %v1682
        %1799 = vmax.xlane.f32.xlu0 %v1798
        %v1800 = vpop.xlane.xlu0 %1799
        %v1801 = vmax.f32 %v1684, %v1686
        %1802 = vmax.xlane.f32.xlu0 %v1801
        %v1803 = vpop.xlane.xlu0 %1802
        %v1804 = vmax.f32 %v1690, %v1692
        %1805 = vmax.xlane.f32.xlu0 %v1804
        %v1806 = vpop.xlane.xlu0 %1805
        %v1807 = vmax.f32 %v1694, %v1696
        %1808 = vmax.xlane.f32.xlu0 %v1807
        %v1809 = vpop.xlane.xlu0 %1808
        %v1810 = vmax.f32 %v1700, %v1702
        %1811 = vmax.xlane.f32.xlu0 %v1810
        %v1812 = vpop.xlane.xlu0 %1811
        %v1813 = vmax.f32 %v1704, %v1706
        %1814 = vmax.xlane.f32.xlu0 %v1813
        %v1815 = vpop.xlane.xlu0 %1814
        %v1816 = vmax.f32 %v1710, %v1712
        %1817 = vmax.xlane.f32.xlu0 %v1816
        %v1818 = vpop.xlane.xlu0 %1817
        %v1819 = vmax.f32 %v1714, %v1716
        %1820 = vmax.xlane.f32.xlu0 %v1819
        %v1821 = vpop.xlane.xlu0 %1820
        %v1822 = vmax.f32 %v1720, %v1722
        %1823 = vmax.xlane.f32.xlu0 %v1822
        %v1824 = vpop.xlane.xlu0 %1823
        %v1825 = vmax.f32 %v1724, %v1726
        %1826 = vmax.xlane.f32.xlu0 %v1825
        %v1827 = vpop.xlane.xlu0 %1826
        %v1828 = vmax.f32 %v1730, %v1732
        %1829 = vmax.xlane.f32.xlu0 %v1828
        %v1830 = vpop.xlane.xlu0 %1829
        %v1831 = vmax.f32 %v1734, %v1736
        %1832 = vmax.xlane.f32.xlu0 %v1831
        %v1833 = vpop.xlane.xlu0 %1832
        %v1834 = vsub.f32 %v1580, %v1740
        %v1835 = vsub.f32 %v1582, %v1740
        %v1836 = vsub.f32 %v1584, %v1743
        %v1837 = vsub.f32 %v1586, %v1743
        %v1838 = vsub.f32 %v1590, %v1746
        %v1839 = vsub.f32 %v1592, %v1746
        %v1840 = vsub.f32 %v1594, %v1749
        %v1841 = vsub.f32 %v1596, %v1749
        %v1842 = vsub.f32 %v1600, %v1752
        %v1843 = vsub.f32 %v1602, %v1752
        %v1844 = vsub.f32 %v1604, %v1755
        %v1845 = vsub.f32 %v1606, %v1755
        %v1846 = vsub.f32 %v1610, %v1758
        %v1847 = vsub.f32 %v1612, %v1758
        %v1848 = vsub.f32 %v1614, %v1761
        %v1849 = vsub.f32 %v1616, %v1761
        %v1850 = vsub.f32 %v1620, %v1764
        %v1851 = vsub.f32 %v1622, %v1764
        %v1852 = vsub.f32 %v1624, %v1767
        %v1853 = vsub.f32 %v1626, %v1767
        %v1854 = vsub.f32 %v1630, %v1770
        %v1855 = vsub.f32 %v1632, %v1770
        %v1856 = vsub.f32 %v1634, %v1773
        %v1857 = vsub.f32 %v1636, %v1773
        %v1858 = vsub.f32 %v1640, %v1776
        %v1859 = vsub.f32 %v1642, %v1776
        %v1860 = vsub.f32 %v1644, %v1779
        %v1861 = vsub.f32 %v1646, %v1779
        %v1862 = vsub.f32 %v1650, %v1782
        %v1863 = vsub.f32 %v1652, %v1782
        %v1864 = vsub.f32 %v1654, %v1785
        %v1865 = vsub.f32 %v1656, %v1785
        %v1866 = vsub.f32 %v1660, %v1788
        %v1867 = vsub.f32 %v1662, %v1788
        %v1868 = vsub.f32 %v1664, %v1791
        %v1869 = vsub.f32 %v1666, %v1791
        %v1870 = vsub.f32 %v1670, %v1794
        %v1871 = vsub.f32 %v1672, %v1794
        %v1872 = vsub.f32 %v1674, %v1797
        %v1873 = vsub.f32 %v1676, %v1797
        %v1874 = vsub.f32 %v1680, %v1800
        %v1875 = vsub.f32 %v1682, %v1800
        %v1876 = vsub.f32 %v1684, %v1803
        %v1877 = vsub.f32 %v1686, %v1803
        %v1878 = vsub.f32 %v1690, %v1806
        %v1879 = vsub.f32 %v1692, %v1806
        %v1880 = vsub.f32 %v1694, %v1809
        %v1881 = vsub.f32 %v1696, %v1809
        %v1882 = vsub.f32 %v1700, %v1812
        %v1883 = vsub.f32 %v1702, %v1812
        %v1884 = vsub.f32 %v1704, %v1815
        %v1885 = vsub.f32 %v1706, %v1815
        %v1886 = vsub.f32 %v1710, %v1818
        %v1887 = vsub.f32 %v1712, %v1818
        %v1888 = vsub.f32 %v1714, %v1821
        %v1889 = vsub.f32 %v1716, %v1821
        %v1890 = vsub.f32 %v1720, %v1824
        %v1891 = vsub.f32 %v1722, %v1824
        %v1892 = vsub.f32 %v1724, %v1827
        %v1893 = vsub.f32 %v1726, %v1827
        %v1894 = vsub.f32 %v1730, %v1830
        %v1895 = vsub.f32 %v1732, %v1830
        %v1896 = vsub.f32 %v1734, %v1833
        %v1897 = vsub.f32 %v1736, %v1833
        %v1898 = vmul.f32 %v1834, 1.442695
        %v1899 = vpow.pop %v1898
        %v1900 = vmul.f32 %v1835, 1.442695
        %v1901 = vpow.pop %v1900
        %v1902 = vmul.f32 %v1836, 1.442695
        %v1903 = vpow.pop %v1902
        %v1904 = vmul.f32 %v1837, 1.442695
        %v1905 = vpow.pop %v1904
        %v1906 = vmul.f32 %v1838, 1.442695
        %v1907 = vpow.pop %v1906
        %v1908 = vmul.f32 %v1839, 1.442695
        %v1909 = vpow.pop %v1908
        %v1910 = vmul.f32 %v1840, 1.442695
        %v1911 = vpow.pop %v1910
        %v1912 = vmul.f32 %v1841, 1.442695
        %v1913 = vpow.pop %v1912
        %v1914 = vmul.f32 %v1842, 1.442695
        %v1915 = vpow.pop %v1914
        %v1916 = vmul.f32 %v1843, 1.442695
        %v1917 = vpow.pop %v1916
        %v1918 = vmul.f32 %v1844, 1.442695
        %v1919 = vpow.pop %v1918
        %v1920 = vmul.f32 %v1845, 1.442695
        %v1921 = vpow.pop %v1920
        %v1922 = vmul.f32 %v1846, 1.442695
        %v1923 = vpow.pop %v1922
        %v1924 = vmul.f32 %v1847, 1.442695
        %v1925 = vpow.pop %v1924
        %v1926 = vmul.f32 %v1848, 1.442695
        %v1927 = vpow.pop %v1926
        %v1928 = vmul.f32 %v1849, 1.442695
        %v1929 = vpow.pop %v1928
        %v1930 = vmul.f32 %v1850, 1.442695
        %v1931 = vpow.pop %v1930
        %v1932 = vmul.f32 %v1851, 1.442695
        %v1933 = vpow.pop %v1932
        %v1934 = vmul.f32 %v1852, 1.442695
        %v1935 = vpow.pop %v1934
        %v1936 = vmul.f32 %v1853, 1.442695
        %v1937 = vpow.pop %v1936
        %v1938 = vmul.f32 %v1854, 1.442695
        %v1939 = vpow.pop %v1938
        %v1940 = vmul.f32 %v1855, 1.442695
        %v1941 = vpow.pop %v1940
        %v1942 = vmul.f32 %v1856, 1.442695
        %v1943 = vpow.pop %v1942
        %v1944 = vmul.f32 %v1857, 1.442695
        %v1945 = vpow.pop %v1944
        %v1946 = vmul.f32 %v1858, 1.442695
        %v1947 = vpow.pop %v1946
        %v1948 = vmul.f32 %v1859, 1.442695
        %v1949 = vpow.pop %v1948
        %v1950 = vmul.f32 %v1860, 1.442695
        %v1951 = vpow.pop %v1950
        %v1952 = vmul.f32 %v1861, 1.442695
        %v1953 = vpow.pop %v1952
        %v1954 = vmul.f32 %v1862, 1.442695
        %v1955 = vpow.pop %v1954
        %v1956 = vmul.f32 %v1863, 1.442695
        %v1957 = vpow.pop %v1956
        %v1958 = vmul.f32 %v1864, 1.442695
        %v1959 = vpow.pop %v1958
        %v1960 = vmul.f32 %v1865, 1.442695
        %v1961 = vpow.pop %v1960
        %v1962 = vmul.f32 %v1866, 1.442695
        %v1963 = vpow.pop %v1962
        %v1964 = vmul.f32 %v1867, 1.442695
        %v1965 = vpow.pop %v1964
        %v1966 = vmul.f32 %v1868, 1.442695
        %v1967 = vpow.pop %v1966
        %v1968 = vmul.f32 %v1869, 1.442695
        %v1969 = vpow.pop %v1968
        %v1970 = vmul.f32 %v1870, 1.442695
        %v1971 = vpow.pop %v1970
        %v1972 = vmul.f32 %v1871, 1.442695
        %v1973 = vpow.pop %v1972
        %v1974 = vmul.f32 %v1872, 1.442695
        %v1975 = vpow.pop %v1974
        %v1976 = vmul.f32 %v1873, 1.442695
        %v1977 = vpow.pop %v1976
        %v1978 = vmul.f32 %v1874, 1.442695
        %v1979 = vpow.pop %v1978
        %v1980 = vmul.f32 %v1875, 1.442695
        %v1981 = vpow.pop %v1980
        %v1982 = vmul.f32 %v1876, 1.442695
        %v1983 = vpow.pop %v1982
        %v1984 = vmul.f32 %v1877, 1.442695
        %v1985 = vpow.pop %v1984
        %v1986 = vmul.f32 %v1878, 1.442695
        %v1987 = vpow.pop %v1986
        %v1988 = vmul.f32 %v1879, 1.442695
        %v1989 = vpow.pop %v1988
        %v1990 = vmul.f32 %v1880, 1.442695
        %v1991 = vpow.pop %v1990
        %v1992 = vmul.f32 %v1881, 1.442695
        %v1993 = vpow.pop %v1992
        %v1994 = vmul.f32 %v1882, 1.442695
        %v1995 = vpow.pop %v1994
        %v1996 = vmul.f32 %v1883, 1.442695
        %v1997 = vpow.pop %v1996
        %v1998 = vmul.f32 %v1884, 1.442695
        %v1999 = vpow.pop %v1998
        %v2000 = vmul.f32 %v1885, 1.442695
        %v2001 = vpow.pop %v2000
        %v2002 = vmul.f32 %v1886, 1.442695
        %v2003 = vpow.pop %v2002
        %v2004 = vmul.f32 %v1887, 1.442695
        %v2005 = vpow.pop %v2004
        %v2006 = vmul.f32 %v1888, 1.442695
        %v2007 = vpow.pop %v2006
        %v2008 = vmul.f32 %v1889, 1.442695
        %v2009 = vpow.pop %v2008
        %v2010 = vmul.f32 %v1890, 1.442695
        %v2011 = vpow.pop %v2010
        %v2012 = vmul.f32 %v1891, 1.442695
        %v2013 = vpow.pop %v2012
        %v2014 = vmul.f32 %v1892, 1.442695
        %v2015 = vpow.pop %v2014
        %v2016 = vmul.f32 %v1893, 1.442695
        %v2017 = vpow.pop %v2016
        %v2018 = vmul.f32 %v1894, 1.442695
        %v2019 = vpow.pop %v2018
        %v2020 = vmul.f32 %v1895, 1.442695
        %v2021 = vpow.pop %v2020
        %v2022 = vmul.f32 %v1896, 1.442695
        %v2023 = vpow.pop %v2022
        %v2024 = vmul.f32 %v1897, 1.442695
        %v2025 = vpow.pop %v2024
        %v2026 = vadd.f32 %v1899, %v1901
        %2027 = vadd.xlane.f32.xlu0 %v2026
        %v2028 = vpop.xlane.xlu0 %2027
        %v2029 = vadd.f32 %v1903, %v1905
        %2030 = vadd.xlane.f32.xlu0 %v2029
        %v2031 = vpop.xlane.xlu0 %2030
        %v2032 = vadd.f32 %v1907, %v1909
        %2033 = vadd.xlane.f32.xlu0 %v2032
        %v2034 = vpop.xlane.xlu0 %2033
        %v2035 = vadd.f32 %v1911, %v1913
        %2036 = vadd.xlane.f32.xlu0 %v2035
        %v2037 = vpop.xlane.xlu0 %2036
        %v2038 = vadd.f32 %v1915, %v1917
        %2039 = vadd.xlane.f32.xlu0 %v2038
        %v2040 = vpop.xlane.xlu0 %2039
        %v2041 = vadd.f32 %v1919, %v1921
        %2042 = vadd.xlane.f32.xlu0 %v2041
        %v2043 = vpop.xlane.xlu0 %2042
        %v2044 = vadd.f32 %v1923, %v1925
        %2045 = vadd.xlane.f32.xlu0 %v2044
        %v2046 = vpop.xlane.xlu0 %2045
        %v2047 = vadd.f32 %v1927, %v1929
        %2048 = vadd.xlane.f32.xlu0 %v2047
        %v2049 = vpop.xlane.xlu0 %2048
        %v2050 = vadd.f32 %v1931, %v1933
        %2051 = vadd.xlane.f32.xlu0 %v2050
        %v2052 = vpop.xlane.xlu0 %2051
        %v2053 = vadd.f32 %v1935, %v1937
        %2054 = vadd.xlane.f32.xlu0 %v2053
        %v2055 = vpop.xlane.xlu0 %2054
        %v2056 = vadd.f32 %v1939, %v1941
        %2057 = vadd.xlane.f32.xlu0 %v2056
        %v2058 = vpop.xlane.xlu0 %2057
        %v2059 = vadd.f32 %v1943, %v1945
        %2060 = vadd.xlane.f32.xlu0 %v2059
        %v2061 = vpop.xlane.xlu0 %2060
        %v2062 = vadd.f32 %v1947, %v1949
        %2063 = vadd.xlane.f32.xlu0 %v2062
        %v2064 = vpop.xlane.xlu0 %2063
        %v2065 = vadd.f32 %v1951, %v1953
        %2066 = vadd.xlane.f32.xlu0 %v2065
        %v2067 = vpop.xlane.xlu0 %2066
        %v2068 = vadd.f32 %v1955, %v1957
        %2069 = vadd.xlane.f32.xlu0 %v2068
        %v2070 = vpop.xlane.xlu0 %2069
        %v2071 = vadd.f32 %v1959, %v1961
        %2072 = vadd.xlane.f32.xlu0 %v2071
        %v2073 = vpop.xlane.xlu0 %2072
        %v2074 = vadd.f32 %v1963, %v1965
        %2075 = vadd.xlane.f32.xlu0 %v2074
        %v2076 = vpop.xlane.xlu0 %2075
        %v2077 = vadd.f32 %v1967, %v1969
        %2078 = vadd.xlane.f32.xlu0 %v2077
        %v2079 = vpop.xlane.xlu0 %2078
        %v2080 = vadd.f32 %v1971, %v1973
        %2081 = vadd.xlane.f32.xlu0 %v2080
        %v2082 = vpop.xlane.xlu0 %2081
        %v2083 = vadd.f32 %v1975, %v1977
        %2084 = vadd.xlane.f32.xlu0 %v2083
        %v2085 = vpop.xlane.xlu0 %2084
        %v2086 = vadd.f32 %v1979, %v1981
        %2087 = vadd.xlane.f32.xlu0 %v2086
        %v2088 = vpop.xlane.xlu0 %2087
        %v2089 = vadd.f32 %v1983, %v1985
        %2090 = vadd.xlane.f32.xlu0 %v2089
        %v2091 = vpop.xlane.xlu0 %2090
        %v2092 = vadd.f32 %v1987, %v1989
        %2093 = vadd.xlane.f32.xlu0 %v2092
        %v2094 = vpop.xlane.xlu0 %2093
        %v2095 = vadd.f32 %v1991, %v1993
        %2096 = vadd.xlane.f32.xlu0 %v2095
        %v2097 = vpop.xlane.xlu0 %2096
        %v2098 = vadd.f32 %v1995, %v1997
        %2099 = vadd.xlane.f32.xlu0 %v2098
        %v2100 = vpop.xlane.xlu0 %2099
        %v2101 = vadd.f32 %v1999, %v2001
        %2102 = vadd.xlane.f32.xlu0 %v2101
        %v2103 = vpop.xlane.xlu0 %2102
        %v2104 = vadd.f32 %v2003, %v2005
        %2105 = vadd.xlane.f32.xlu0 %v2104
        %v2106 = vpop.xlane.xlu0 %2105
        %v2107 = vadd.f32 %v2007, %v2009
        %2108 = vadd.xlane.f32.xlu0 %v2107
        %v2109 = vpop.xlane.xlu0 %2108
        %v2110 = vadd.f32 %v2011, %v2013
        %2111 = vadd.xlane.f32.xlu0 %v2110
        %v2112 = vpop.xlane.xlu0 %2111
        %v2113 = vadd.f32 %v2015, %v2017
        %2114 = vadd.xlane.f32.xlu0 %v2113
        %v2115 = vpop.xlane.xlu0 %2114
        %v2116 = vadd.f32 %v2019, %v2021
        %2117 = vadd.xlane.f32.xlu0 %v2116
        %v2118 = vpop.xlane.xlu0 %2117
        %v2119 = vadd.f32 %v2023, %v2025
        %2120 = vadd.xlane.f32.xlu0 %v2119
        %v2121 = vpop.xlane.xlu0 %2120
        %v2122 = vpack.c.bf16 %v1903, %v1899
        %v2123 = vpack.c.bf16 %v1905, %v1901
        %v2124 = vpack.c.bf16 %v1911, %v1907
        %v2125 = vpack.c.bf16 %v1913, %v1909
        %v2126 = vpack.c.bf16 %v1919, %v1915
        %v2127 = vpack.c.bf16 %v1921, %v1917
        %v2128 = vpack.c.bf16 %v1927, %v1923
        %v2129 = vpack.c.bf16 %v1929, %v1925
        %v2130 = vpack.c.bf16 %v1935, %v1931
        %v2131 = vpack.c.bf16 %v1937, %v1933
        %v2132 = vpack.c.bf16 %v1943, %v1939
        %v2133 = vpack.c.bf16 %v1945, %v1941
        %v2134 = vpack.c.bf16 %v1951, %v1947
        %v2135 = vpack.c.bf16 %v1953, %v1949
        %v2136 = vpack.c.bf16 %v1959, %v1955
        %v2137 = vpack.c.bf16 %v1961, %v1957
        %v2138 = vpack.c.bf16 %v1967, %v1963
        %v2139 = vpack.c.bf16 %v1969, %v1965
        %v2140 = vpack.c.bf16 %v1975, %v1971
        %v2141 = vpack.c.bf16 %v1977, %v1973
        %v2142 = vpack.c.bf16 %v1983, %v1979
        %v2143 = vpack.c.bf16 %v1985, %v1981
        %v2144 = vpack.c.bf16 %v1991, %v1987
        %v2145 = vpack.c.bf16 %v1993, %v1989
        %v2146 = vpack.c.bf16 %v1999, %v1995
        %v2147 = vpack.c.bf16 %v2001, %v1997
        %v2148 = vpack.c.bf16 %v2007, %v2003
        %v2149 = vpack.c.bf16 %v2009, %v2005
        %v2150 = vpack.c.bf16 %v2015, %v2011
        %v2151 = vpack.c.bf16 %v2017, %v2013
        %v2152 = vpack.c.bf16 %v2023, %v2019
        %v2153 = vpack.c.bf16 %v2025, %v2021
        %2170 = vrot.lane.b32.xlu0 %v1473, 64
        %v2171 = vpop.permute.xlu0 %2170
        %2172 = vrot.lane.b32.xlu0 %v1474, 64
        %v2173 = vpop.permute.xlu0 %2172
        %2174 = vrot.lane.b32.xlu0 %v1475, 64
        %v2175 = vpop.permute.xlu0 %2174
        %2176 = vrot.lane.b32.xlu0 %v1476, 64
        %v2177 = vpop.permute.xlu0 %2176
        %2178 = vrot.lane.b32.xlu0 %v1477, 64
        %v2179 = vpop.permute.xlu0 %2178
        %2180 = vrot.lane.b32.xlu0 %v1478, 64
        %v2181 = vpop.permute.xlu0 %2180
        %2182 = vrot.lane.b32.xlu0 %v1479, 64
        %v2183 = vpop.permute.xlu0 %2182
        %2184 = vrot.lane.b32.xlu0 %v1480, 64
        %v2185 = vpop.permute.xlu0 %2184
        %2186 = vrot.lane.b32.xlu0 %v1481, 64
        %v2187 = vpop.permute.xlu0 %2186
        %2188 = vrot.lane.b32.xlu0 %v1482, 64
        %v2189 = vpop.permute.xlu0 %2188
        %2190 = vrot.lane.b32.xlu0 %v1483, 64
        %v2191 = vpop.permute.xlu0 %2190
        %2192 = vrot.lane.b32.xlu0 %v1484, 64
        %v2193 = vpop.permute.xlu0 %2192
        %2194 = vrot.lane.b32.xlu0 %v1485, 64
        %v2195 = vpop.permute.xlu0 %2194
        %2196 = vrot.lane.b32.xlu0 %v1486, 64
        %v2197 = vpop.permute.xlu0 %2196
        %2198 = vrot.lane.b32.xlu0 %v1487, 64
        %v2199 = vpop.permute.xlu0 %2198
        %2200 = vrot.lane.b32.xlu0 %v1488, 64
        %v2201 = vpop.permute.xlu0 %2200
        %2218 = vmatprep.subr.bf16.mxu0 0
        %2219 = vmatpush1.bf16.msra.mxu0 %v2171
        %2220 = vmatprep.subr.bf16.mxu0 0
        %2221 = vmatpush1.bf16.msra.mxu0 %v2173
        %2222 = vmatprep.subr.bf16.mxu0 0
        %2223 = vmatpush1.bf16.msra.mxu0 %v2175
        %2224 = vmatprep.subr.bf16.mxu0 0
        %2225 = vmatpush1.bf16.msra.mxu0 %v2177
        %2226 = vmatprep.subr.bf16.mxu0 0
        %2227 = vmatpush1.bf16.msra.mxu0 %v2179
        %2228 = vmatprep.subr.bf16.mxu0 0
        %2229 = vmatpush1.bf16.msra.mxu0 %v2181
        %2230 = vmatprep.subr.bf16.mxu0 0
        %2231 = vmatpush1.bf16.msra.mxu0 %v2183
        %2232 = vmatprep.subr.bf16.mxu0 0
        %2233 = vmatpush1.bf16.msra.mxu0 %v2185
        %2234 = vmatprep.subr.bf16.mxu0 0
        %2235 = vmatpush1.bf16.msra.mxu0 %v2187
        %2236 = vmatprep.subr.bf16.mxu0 0
        %2237 = vmatpush1.bf16.msra.mxu0 %v2189
        %2238 = vmatprep.subr.bf16.mxu0 0
        %2239 = vmatpush1.bf16.msra.mxu0 %v2191
        %2240 = vmatprep.subr.bf16.mxu0 0
        %2241 = vmatpush1.bf16.msra.mxu0 %v2193
        %2242 = vmatprep.subr.bf16.mxu0 0
        %2243 = vmatpush1.bf16.msra.mxu0 %v2195
        %2244 = vmatprep.subr.bf16.mxu0 0
        %2245 = vmatpush1.bf16.msra.mxu0 %v2197
        %2246 = vmatprep.subr.bf16.mxu0 0
        %2247 = vmatpush1.bf16.msra.mxu0 %v2199
        %2248 = vmatprep.subr.bf16.mxu0 0
        %2249 = vmatpush1.bf16.msra.mxu0 %v2201
        %2250 = vmatprep.mubr.bf16.mxu0 %v2123
        %2251 = vmatmul.mubr.bf16.gmra.mrb[0].mxu0 %v2122
        %v2252 = vpop.f32.mrb[0].mxu0
        %v2253 = vadd.f32 0.0, %v2252
        %v2254 = vpop.f32.mrb[0].mxu0
        %v2255 = vpop.f32.mrb[0].mxu0
        %v2256 = vadd.f32 0.0, %v2255
        %v2257 = vpop.f32.mrb[0].mxu0
        %2258 = vmatprep.mubr.bf16.mxu0 %v2125
        %2259 = vmatmul.mubr.bf16.gmra.mrb[0].mxu0 %v2124
        %v2260 = vpop.f32.mrb[0].mxu0
        %v2261 = vadd.f32 0.0, %v2260
        %v2262 = vpop.f32.mrb[0].mxu0
        %v2263 = vpop.f32.mrb[0].mxu0
        %v2264 = vadd.f32 0.0, %v2263
        %v2265 = vpop.f32.mrb[0].mxu0
        %2266 = vmatprep.mubr.bf16.mxu0 %v2127
        %2267 = vmatmul.mubr.bf16.gmra.mrb[0].mxu0 %v2126
        %v2268 = vpop.f32.mrb[0].mxu0
        %v2269 = vadd.f32 0.0, %v2268
        %v2270 = vpop.f32.mrb[0].mxu0
        %v2271 = vpop.f32.mrb[0].mxu0
        %v2272 = vadd.f32 0.0, %v2271
        %v2273 = vpop.f32.mrb[0].mxu0
        %2274 = vmatprep.mubr.bf16.mxu0 %v2129
        %2275 = vmatmul.mubr.bf16.gmra.mrb[0].mxu0 %v2128
        %v2276 = vpop.f32.mrb[0].mxu0
        %v2277 = vadd.f32 0.0, %v2276
        %v2278 = vpop.f32.mrb[0].mxu0
        %v2279 = vpop.f32.mrb[0].mxu0
        %v2280 = vadd.f32 0.0, %v2279
        %v2281 = vpop.f32.mrb[0].mxu0
        %2282 = vmatprep.mubr.bf16.mxu0 %v2131
        %2283 = vmatmul.mubr.bf16.gmra.mrb[0].mxu0 %v2130
        %v2284 = vpop.f32.mrb[0].mxu0
        %v2285 = vadd.f32 0.0, %v2284
        %v2286 = vpop.f32.mrb[0].mxu0
        %v2287 = vpop.f32.mrb[0].mxu0
        %v2288 = vadd.f32 0.0, %v2287
        %v2289 = vpop.f32.mrb[0].mxu0
        %2290 = vmatprep.mubr.bf16.mxu0 %v2133
        %2291 = vmatmul.mubr.bf16.gmra.mrb[0].mxu0 %v2132
        %v2292 = vpop.f32.mrb[0].mxu0
        %v2293 = vadd.f32 0.0, %v2292
        %v2294 = vpop.f32.mrb[0].mxu0
        %v2295 = vpop.f32.mrb[0].mxu0
        %v2296 = vadd.f32 0.0, %v2295
        %v2297 = vpop.f32.mrb[0].mxu0
        %2298 = vmatprep.mubr.bf16.mxu0 %v2135
        %2299 = vmatmul.mubr.bf16.gmra.mrb[0].mxu0 %v2134
        %v2300 = vpop.f32.mrb[0].mxu0
        %v2301 = vadd.f32 0.0, %v2300
        %v2302 = vpop.f32.mrb[0].mxu0
        %v2303 = vpop.f32.mrb[0].mxu0
        %v2304 = vadd.f32 0.0, %v2303
        %v2305 = vpop.f32.mrb[0].mxu0
        %2306 = vmatprep.mubr.bf16.mxu0 %v2137
        %2307 = vmatmul.mubr.bf16.gmra.mrb[0].mxu0 %v2136
        %v2308 = vpop.f32.mrb[0].mxu0
        %v2309 = vadd.f32 0.0, %v2308
        %v2310 = vpop.f32.mrb[0].mxu0
        %v2311 = vpop.f32.mrb[0].mxu0
        %v2312 = vadd.f32 0.0, %v2311
        %v2313 = vpop.f32.mrb[0].mxu0
        %2314 = vmatprep.mubr.bf16.mxu0 %v2139
        %2315 = vmatmul.mubr.bf16.gmra.mrb[0].mxu0 %v2138
        %v2316 = vpop.f32.mrb[0].mxu0
        %v2317 = vadd.f32 0.0, %v2316
        %v2318 = vpop.f32.mrb[0].mxu0
        %v2319 = vpop.f32.mrb[0].mxu0
        %v2320 = vadd.f32 0.0, %v2319
        %v2321 = vpop.f32.mrb[0].mxu0
        %2322 = vmatprep.mubr.bf16.mxu0 %v2141
        %2323 = vmatmul.mubr.bf16.gmra.mrb[0].mxu0 %v2140
        %v2324 = vpop.f32.mrb[0].mxu0
        %v2325 = vadd.f32 0.0, %v2324
        %v2326 = vpop.f32.mrb[0].mxu0
        %v2327 = vpop.f32.mrb[0].mxu0
        %v2328 = vadd.f32 0.0, %v2327
        %v2329 = vpop.f32.mrb[0].mxu0
        %2330 = vmatprep.mubr.bf16.mxu0 %v2143
        %2331 = vmatmul.mubr.bf16.gmra.mrb[0].mxu0 %v2142
        %v2332 = vpop.f32.mrb[0].mxu0
        %v2333 = vadd.f32 0.0, %v2332
        %v2334 = vpop.f32.mrb[0].mxu0
        %v2335 = vpop.f32.mrb[0].mxu0
        %v2336 = vadd.f32 0.0, %v2335
        %v2337 = vpop.f32.mrb[0].mxu0
        %2338 = vmatprep.mubr.bf16.mxu0 %v2145
        %2339 = vmatmul.mubr.bf16.gmra.mrb[0].mxu0 %v2144
        %v2340 = vpop.f32.mrb[0].mxu0
        %v2341 = vadd.f32 0.0, %v2340
        %v2342 = vpop.f32.mrb[0].mxu0
        %v2343 = vpop.f32.mrb[0].mxu0
        %v2344 = vadd.f32 0.0, %v2343
        %v2345 = vpop.f32.mrb[0].mxu0
        %2346 = vmatprep.mubr.bf16.mxu0 %v2147
        %2347 = vmatmul.mubr.bf16.gmra.mrb[0].mxu0 %v2146
        %v2348 = vpop.f32.mrb[0].mxu0
        %v2349 = vadd.f32 0.0, %v2348
        %v2350 = vpop.f32.mrb[0].mxu0
        %v2351 = vpop.f32.mrb[0].mxu0
        %v2352 = vadd.f32 0.0, %v2351
        %v2353 = vpop.f32.mrb[0].mxu0
        %2354 = vmatprep.mubr.bf16.mxu0 %v2149
        %2355 = vmatmul.mubr.bf16.gmra.mrb[0].mxu0 %v2148
        %v2356 = vpop.f32.mrb[0].mxu0
        %v2357 = vadd.f32 0.0, %v2356
        %v2358 = vpop.f32.mrb[0].mxu0
        %v2359 = vpop.f32.mrb[0].mxu0
        %v2360 = vadd.f32 0.0, %v2359
        %v2361 = vpop.f32.mrb[0].mxu0
        %2362 = vmatprep.mubr.bf16.mxu0 %v2151
        %2363 = vmatmul.mubr.bf16.gmra.mrb[0].mxu0 %v2150
        %v2364 = vpop.f32.mrb[0].mxu0
        %v2365 = vadd.f32 0.0, %v2364
        %v2366 = vpop.f32.mrb[0].mxu0
        %v2367 = vpop.f32.mrb[0].mxu0
        %v2368 = vadd.f32 0.0, %v2367
        %v2369 = vpop.f32.mrb[0].mxu0
        %2370 = vmatprep.mubr.bf16.mxu0 %v2153
        %2371 = vmatmul.mubr.bf16.gmra.mrb[0].mxu0 %v2152
        %v2372 = vpop.f32.mrb[0].mxu0
        %v2373 = vadd.f32 0.0, %v2372
        %v2374 = vpop.f32.mrb[0].mxu0
        %v2375 = vpop.f32.mrb[0].mxu0
        %v2376 = vadd.f32 0.0, %v2375
        %v2377 = vpop.f32.mrb[0].mxu0
        %2378 = vdwg.mxu0
        %v2379 = vrcp.pop %v2028
        %v2380 = vrcp.pop %v2031
        %v2381 = vrcp.pop %v2034
        %v2382 = vrcp.pop %v2037
        %v2383 = vrcp.pop %v2040
        %v2384 = vrcp.pop %v2043
        %v2385 = vrcp.pop %v2046
        %v2386 = vrcp.pop %v2049
        %v2387 = vrcp.pop %v2052
        %v2388 = vrcp.pop %v2055
        %v2389 = vrcp.pop %v2058
        %v2390 = vrcp.pop %v2061
        %v2391 = vrcp.pop %v2064
        %v2392 = vrcp.pop %v2067
        %v2393 = vrcp.pop %v2070
        %v2394 = vrcp.pop %v2073
        %v2395 = vrcp.pop %v2076
        %v2396 = vrcp.pop %v2079
        %v2397 = vrcp.pop %v2082
        %v2398 = vrcp.pop %v2085
        %v2399 = vrcp.pop %v2088
        %v2400 = vrcp.pop %v2091
        %v2401 = vrcp.pop %v2094
        %v2402 = vrcp.pop %v2097
        %v2403 = vrcp.pop %v2100
        %v2404 = vrcp.pop %v2103
        %v2405 = vrcp.pop %v2106
        %v2406 = vrcp.pop %v2109
        %v2407 = vrcp.pop %v2112
        %v2408 = vrcp.pop %v2115
        %v2409 = vrcp.pop %v2118
        %v2410 = vrcp.pop %v2121
        %v2411 = vmul.f32 %v2253, %v2379
        %v2412 = vmul.f32 %v2256, %v2380
        %v2413 = vmul.f32 %v2261, %v2381
        %v2414 = vmul.f32 %v2264, %v2382
        %v2415 = vmul.f32 %v2269, %v2383
        %v2416 = vmul.f32 %v2272, %v2384
        %v2417 = vmul.f32 %v2277, %v2385
        %v2418 = vmul.f32 %v2280, %v2386
        %v2419 = vmul.f32 %v2285, %v2387
        %v2420 = vmul.f32 %v2288, %v2388
        %v2421 = vmul.f32 %v2293, %v2389
        %v2422 = vmul.f32 %v2296, %v2390
        %v2423 = vmul.f32 %v2301, %v2391
        %v2424 = vmul.f32 %v2304, %v2392
        %v2425 = vmul.f32 %v2309, %v2393
        %v2426 = vmul.f32 %v2312, %v2394
        %v2427 = vmul.f32 %v2317, %v2395
        %v2428 = vmul.f32 %v2320, %v2396
        %v2429 = vmul.f32 %v2325, %v2397
        %v2430 = vmul.f32 %v2328, %v2398
        %v2431 = vmul.f32 %v2333, %v2399
        %v2432 = vmul.f32 %v2336, %v2400
        %v2433 = vmul.f32 %v2341, %v2401
        %v2434 = vmul.f32 %v2344, %v2402
        %v2435 = vmul.f32 %v2349, %v2403
        %v2436 = vmul.f32 %v2352, %v2404
        %v2437 = vmul.f32 %v2357, %v2405
        %v2438 = vmul.f32 %v2360, %v2406
        %v2439 = vmul.f32 %v2365, %v2407
        %v2440 = vmul.f32 %v2368, %v2408
        %v2441 = vmul.f32 %v2373, %v2409
        %v2442 = vmul.f32 %v2376, %v2410
        %v2443 = vpack.c.bf16 %v2412, %v2411
        %v2444 = vpack.c.bf16 %v2414, %v2413
        %v2445 = vpack.c.bf16 %v2416, %v2415
        %v2446 = vpack.c.bf16 %v2418, %v2417
        %v2447 = vpack.c.bf16 %v2420, %v2419
        %v2448 = vpack.c.bf16 %v2422, %v2421
        %v2449 = vpack.c.bf16 %v2424, %v2423
        %v2450 = vpack.c.bf16 %v2426, %v2425
        %v2451 = vpack.c.bf16 %v2428, %v2427
        %v2452 = vpack.c.bf16 %v2430, %v2429
        %v2453 = vpack.c.bf16 %v2432, %v2431
        %v2454 = vpack.c.bf16 %v2434, %v2433
        %v2455 = vpack.c.bf16 %v2436, %v2435
        %v2456 = vpack.c.bf16 %v2438, %v2437
        %v2457 = vpack.c.bf16 %v2440, %v2439
        %v2458 = vpack.c.bf16 %v2442, %v2441
        %v2459 = vld [vmem:[%s9] sm:$0xf]
        %v2460 = vld [vmem:[%s9 + $0x4] sm:$0xf]
        %v2461 = vld [vmem:[%s9 + $0x8] sm:$0xf]
        %v2462 = vld [vmem:[%s9 + $0xc] sm:$0xf]
        %v2463 = vld [vmem:[%s9 + $0x10] sm:$0xf]
        %v2464 = vld [vmem:[%s9 + $0x14] sm:$0xf]
        %v2465 = vld [vmem:[%s9 + $0x18] sm:$0xf]
        %v2466 = vld [vmem:[%s9 + $0x1c] sm:$0xf]
        %v2467 = vld [vmem:[%s10] sm:$0x1]
        %v2469 = vlaneseq
        %v2470 = vshrl.u32 %v2469, 7
        %v2471 = vsub.s32 0, %v2470
        %v2472 = vrot.slane %v2467, %v2471
        %v2482 = vunpack.c.l.b16 %v2459
        %v2483 = vunpack.c.l.b16 %v2460
        %v2484 = vunpack.c.l.b16 %v2461
        %v2485 = vunpack.c.l.b16 %v2462
        %v2486 = vunpack.c.l.b16 %v2463
        %v2487 = vunpack.c.l.b16 %v2464
        %v2488 = vunpack.c.l.b16 %v2465
        %v2489 = vunpack.c.l.b16 %v2466
        %v2490 = vpack.c.b16 %v2483, %v2482
        %v2491 = vpack.c.b16 %v2485, %v2484
        %v2492 = vpack.c.b16 %v2487, %v2486
        %v2493 = vpack.c.b16 %v2489, %v2488
        %v2499 = vsel %vm536, %v2443, 0
        %v2502 = vsel %vm536, %v2444, 0
        %v2505 = vsel %vm536, %v2445, 0
        %v2508 = vsel %vm536, %v2446, 0
        %v2511 = vsel %vm536, %v2447, 0
        %v2514 = vsel %vm536, %v2448, 0
        %v2517 = vsel %vm536, %v2449, 0
        %v2520 = vsel %vm536, %v2450, 0
        %v2523 = vsel %vm536, %v2451, 0
        %v2526 = vsel %vm536, %v2452, 0
        %v2529 = vsel %vm536, %v2453, 0
        %v2532 = vsel %vm536, %v2454, 0
        %v2535 = vsel %vm536, %v2455, 0
        %v2538 = vsel %vm536, %v2456, 0
        %v2541 = vsel %vm536, %v2457, 0
        %v2544 = vsel %vm536, %v2458, 0
        %2546 = vmatprep.subr.bf16.mxu0 0
        %2547 = vmatpush1.bf16.msra.mxu0 %v2490
        %2548 = vmatprep.subr.bf16.mxu0 0
        %2549 = vmatpush1.bf16.msra.mxu0 %v2491
        %2550 = vmatprep.subr.bf16.mxu0 0
        %2551 = vmatpush1.bf16.msra.mxu0 %v2492
        %2552 = vmatprep.subr.bf16.mxu0 0
        %2553 = vmatpush1.bf16.msra.mxu0 %v2493
        %2554 = vmatprep.subr.bf16.mxu0 0
        %2555 = vmatpush1.bf16.msra.mxu0 0
        %2556 = vmatprep.subr.bf16.mxu0 0
        %2557 = vmatpush1.bf16.msra.mxu0 0
        %2558 = vmatprep.subr.bf16.mxu0 0
        %2559 = vmatpush1.bf16.msra.mxu0 0
        %2560 = vmatprep.subr.bf16.mxu0 0
        %2561 = vmatpush1.bf16.msra.mxu0 0
        %2562 = vmatprep.subr.bf16.mxu0 0
        %2563 = vmatpush1.bf16.msra.mxu0 0
        %2564 = vmatprep.subr.bf16.mxu0 0
        %2565 = vmatpush1.bf16.msra.mxu0 0
        %2566 = vmatprep.subr.bf16.mxu0 0
        %2567 = vmatpush1.bf16.msra.mxu0 0
        %2568 = vmatprep.subr.bf16.mxu0 0
        %2569 = vmatpush1.bf16.msra.mxu0 0
        %2570 = vmatprep.subr.bf16.mxu0 0
        %2571 = vmatpush1.bf16.msra.mxu0 0
        %2572 = vmatprep.subr.bf16.mxu0 0
        %2573 = vmatpush1.bf16.msra.mxu0 0
        %2574 = vmatprep.subr.bf16.mxu0 0
        %2575 = vmatpush1.bf16.msra.mxu0 0
        %2576 = vmatprep.subr.bf16.mxu0 0
        %2577 = vmatpush1.bf16.msra.mxu0 0
        %2578 = vmatprep.mubr.bf16.mxu0 0
        %2579 = vmatmul.mubr.bf16.gmra.mrb[0].mxu0 %v2499
        %v2580 = vpop.f32.mrb[0].mxu0
        %v2581 = vadd.f32 %v2472, %v2580
        %v2582 = vpop.f32.mrb[0].mxu0
        %v2583 = vpop.f32.mrb[0].mxu0
        %v2584 = vadd.f32 %v2472, %v2583
        %v2585 = vpop.f32.mrb[0].mxu0
        %2586 = vmatprep.mubr.bf16.mxu0 0
        %2587 = vmatmul.mubr.bf16.gmra.mrb[0].mxu0 %v2502
        %v2588 = vpop.f32.mrb[0].mxu0
        %v2589 = vadd.f32 %v2472, %v2588
        %v2590 = vpop.f32.mrb[0].mxu0
        %v2591 = vpop.f32.mrb[0].mxu0
        %v2592 = vadd.f32 %v2472, %v2591
        %v2593 = vpop.f32.mrb[0].mxu0
        %2594 = vmatprep.mubr.bf16.mxu0 0
        %2595 = vmatmul.mubr.bf16.gmra.mrb[0].mxu0 %v2505
        %v2596 = vpop.f32.mrb[0].mxu0
        %v2597 = vadd.f32 %v2472, %v2596
        %v2598 = vpop.f32.mrb[0].mxu0
        %v2599 = vpop.f32.mrb[0].mxu0
        %v2600 = vadd.f32 %v2472, %v2599
        %v2601 = vpop.f32.mrb[0].mxu0
        %2602 = vmatprep.mubr.bf16.mxu0 0
        %2603 = vmatmul.mubr.bf16.gmra.mrb[0].mxu0 %v2508
        %v2604 = vpop.f32.mrb[0].mxu0
        %v2605 = vadd.f32 %v2472, %v2604
        %v2606 = vpop.f32.mrb[0].mxu0
        %v2607 = vpop.f32.mrb[0].mxu0
        %v2608 = vadd.f32 %v2472, %v2607
        %v2609 = vpop.f32.mrb[0].mxu0
        %2610 = vmatprep.mubr.bf16.mxu0 0
        %2611 = vmatmul.mubr.bf16.gmra.mrb[0].mxu0 %v2511
        %v2612 = vpop.f32.mrb[0].mxu0
        %v2613 = vadd.f32 %v2472, %v2612
        %v2614 = vpop.f32.mrb[0].mxu0
        %v2615 = vpop.f32.mrb[0].mxu0
        %v2616 = vadd.f32 %v2472, %v2615
        %v2617 = vpop.f32.mrb[0].mxu0
        %2618 = vmatprep.mubr.bf16.mxu0 0
        %2619 = vmatmul.mubr.bf16.gmra.mrb[0].mxu0 %v2514
        %v2620 = vpop.f32.mrb[0].mxu0
        %v2621 = vadd.f32 %v2472, %v2620
        %v2622 = vpop.f32.mrb[0].mxu0
        %v2623 = vpop.f32.mrb[0].mxu0
        %v2624 = vadd.f32 %v2472, %v2623
        %v2625 = vpop.f32.mrb[0].mxu0
        %2626 = vmatprep.mubr.bf16.mxu0 0
        %2627 = vmatmul.mubr.bf16.gmra.mrb[0].mxu0 %v2517
        %v2628 = vpop.f32.mrb[0].mxu0
        %v2629 = vadd.f32 %v2472, %v2628
        %v2630 = vpop.f32.mrb[0].mxu0
        %v2631 = vpop.f32.mrb[0].mxu0
        %v2632 = vadd.f32 %v2472, %v2631
        %v2633 = vpop.f32.mrb[0].mxu0
        %2634 = vmatprep.mubr.bf16.mxu0 0
        %2635 = vmatmul.mubr.bf16.gmra.mrb[0].mxu0 %v2520
        %v2636 = vpop.f32.mrb[0].mxu0
        %v2637 = vadd.f32 %v2472, %v2636
        %v2638 = vpop.f32.mrb[0].mxu0
        %v2639 = vpop.f32.mrb[0].mxu0
        %v2640 = vadd.f32 %v2472, %v2639
        %v2641 = vpop.f32.mrb[0].mxu0
        %2642 = vmatprep.mubr.bf16.mxu0 0
        %2643 = vmatmul.mubr.bf16.gmra.mrb[0].mxu0 %v2523
        %v2644 = vpop.f32.mrb[0].mxu0
        %v2645 = vadd.f32 %v2472, %v2644
        %v2646 = vpop.f32.mrb[0].mxu0
        %v2647 = vpop.f32.mrb[0].mxu0
        %v2648 = vadd.f32 %v2472, %v2647
        %v2649 = vpop.f32.mrb[0].mxu0
        %2650 = vmatprep.mubr.bf16.mxu0 0
        %2651 = vmatmul.mubr.bf16.gmra.mrb[0].mxu0 %v2526
        %v2652 = vpop.f32.mrb[0].mxu0
        %v2653 = vadd.f32 %v2472, %v2652
        %v2654 = vpop.f32.mrb[0].mxu0
        %v2655 = vpop.f32.mrb[0].mxu0
        %v2656 = vadd.f32 %v2472, %v2655
        %v2657 = vpop.f32.mrb[0].mxu0
        %2658 = vmatprep.mubr.bf16.mxu0 0
        %2659 = vmatmul.mubr.bf16.gmra.mrb[0].mxu0 %v2529
        %v2660 = vpop.f32.mrb[0].mxu0
        %v2661 = vadd.f32 %v2472, %v2660
        %v2662 = vpop.f32.mrb[0].mxu0
        %v2663 = vpop.f32.mrb[0].mxu0
        %v2664 = vadd.f32 %v2472, %v2663
        %v2665 = vpop.f32.mrb[0].mxu0
        %2666 = vmatprep.mubr.bf16.mxu0 0
        %2667 = vmatmul.mubr.bf16.gmra.mrb[0].mxu0 %v2532
        %v2668 = vpop.f32.mrb[0].mxu0
        %v2669 = vadd.f32 %v2472, %v2668
        %v2670 = vpop.f32.mrb[0].mxu0
        %v2671 = vpop.f32.mrb[0].mxu0
        %v2672 = vadd.f32 %v2472, %v2671
        %v2673 = vpop.f32.mrb[0].mxu0
        %2674 = vmatprep.mubr.bf16.mxu0 0
        %2675 = vmatmul.mubr.bf16.gmra.mrb[0].mxu0 %v2535
        %v2676 = vpop.f32.mrb[0].mxu0
        %v2677 = vadd.f32 %v2472, %v2676
        %v2678 = vpop.f32.mrb[0].mxu0
        %v2679 = vpop.f32.mrb[0].mxu0
        %v2680 = vadd.f32 %v2472, %v2679
        %v2681 = vpop.f32.mrb[0].mxu0
        %2682 = vmatprep.mubr.bf16.mxu0 0
        %2683 = vmatmul.mubr.bf16.gmra.mrb[0].mxu0 %v2538
        %v2684 = vpop.f32.mrb[0].mxu0
        %v2685 = vadd.f32 %v2472, %v2684
        %v2686 = vpop.f32.mrb[0].mxu0
        %v2687 = vpop.f32.mrb[0].mxu0
        %v2688 = vadd.f32 %v2472, %v2687
        %v2689 = vpop.f32.mrb[0].mxu0
        %2690 = vmatprep.mubr.bf16.mxu0 0
        %2691 = vmatmul.mubr.bf16.gmra.mrb[0].mxu0 %v2541
        %v2692 = vpop.f32.mrb[0].mxu0
        %v2693 = vadd.f32 %v2472, %v2692
        %v2694 = vpop.f32.mrb[0].mxu0
        %v2695 = vpop.f32.mrb[0].mxu0
        %v2696 = vadd.f32 %v2472, %v2695
        %v2697 = vpop.f32.mrb[0].mxu0
        %2698 = vmatprep.mubr.bf16.mxu0 0
        %2699 = vmatmul.mubr.bf16.gmra.mrb[0].mxu0 %v2544
        %v2700 = vpop.f32.mrb[0].mxu0
        %v2701 = vadd.f32 %v2472, %v2700
        %v2702 = vpop.f32.mrb[0].mxu0
        %v2703 = vpop.f32.mrb[0].mxu0
        %v2704 = vadd.f32 %v2472, %v2703
        %v2705 = vpop.f32.mrb[0].mxu0
        %2706 = vdwg.mxu0
        %2707 = vxpose.xlu0.b32.start [1/16] %v2581, 128
        %2708 = vxpose.xlu0.b32.cont [2/16] %v2584, 128
        %2709 = vxpose.xlu0.b32.cont [3/16] %v2589, 128
        %2710 = vxpose.xlu0.b32.cont [4/16] %v2592, 128
        %2711 = vxpose.xlu0.b32.cont [5/16] %v2597, 128
        %2712 = vxpose.xlu0.b32.cont [6/16] %v2600, 128
        %2713 = vxpose.xlu0.b32.cont [7/16] %v2605, 128
        %2714 = vxpose.xlu0.b32.cont [8/16] %v2608, 128
        %2715 = vxpose.xlu0.b32.cont [9/16] %v2613, 128
        %2716 = vxpose.xlu0.b32.cont [10/16] %v2616, 128
        %2717 = vxpose.xlu0.b32.cont [11/16] %v2621, 128
        %2718 = vxpose.xlu0.b32.cont [12/16] %v2624, 128
        %2719 = vxpose.xlu0.b32.cont [13/16] %v2629, 128
        %2720 = vxpose.xlu0.b32.cont [14/16] %v2632, 128
        %2721 = vxpose.xlu0.b32.cont [15/16] %v2637, 128
        %2722 = vxpose.xlu0.b32.end [16/16] %v2640, 128
        %v2723 = vpop.trf.xlu0
        %v2724 = vpop.trf.xlu0
        %v2725 = vpop.trf.xlu0
        %v2726 = vpop.trf.xlu0
        %v2727 = vpop.trf.xlu0
        %v2728 = vpop.trf.xlu0
        %v2729 = vpop.trf.xlu0
        %v2730 = vpop.trf.xlu0
        %v2731 = vpop.trf.xlu0
        %v2732 = vpop.trf.xlu0
        %v2733 = vpop.trf.xlu0
        %v2734 = vpop.trf.xlu0
        %v2735 = vpop.trf.xlu0
        %v2736 = vpop.trf.xlu0
        %v2737 = vpop.trf.xlu0
        %v2738 = vpop.trf.xlu0
        %2739 = vxpose.xlu0.b32.start [1/16] %v2645, 128
        %2740 = vxpose.xlu0.b32.cont [2/16] %v2648, 128
        %2741 = vxpose.xlu0.b32.cont [3/16] %v2653, 128
        %2742 = vxpose.xlu0.b32.cont [4/16] %v2656, 128
        %2743 = vxpose.xlu0.b32.cont [5/16] %v2661, 128
        %2744 = vxpose.xlu0.b32.cont [6/16] %v2664, 128
        %2745 = vxpose.xlu0.b32.cont [7/16] %v2669, 128
        %2746 = vxpose.xlu0.b32.cont [8/16] %v2672, 128
        %2747 = vxpose.xlu0.b32.cont [9/16] %v2677, 128
        %2748 = vxpose.xlu0.b32.cont [10/16] %v2680, 128
        %2749 = vxpose.xlu0.b32.cont [11/16] %v2685, 128
        %2750 = vxpose.xlu0.b32.cont [12/16] %v2688, 128
        %2751 = vxpose.xlu0.b32.cont [13/16] %v2693, 128
        %2752 = vxpose.xlu0.b32.cont [14/16] %v2696, 128
        %2753 = vxpose.xlu0.b32.cont [15/16] %v2701, 128
        %2754 = vxpose.xlu0.b32.end [16/16] %v2704, 128
        %v2755 = vpop.trf.xlu0
        %v2756 = vpop.trf.xlu0
        %v2757 = vpop.trf.xlu0
        %v2758 = vpop.trf.xlu0
        %v2759 = vpop.trf.xlu0
        %v2760 = vpop.trf.xlu0
        %v2761 = vpop.trf.xlu0
        %v2762 = vpop.trf.xlu0
        %v2763 = vpop.trf.xlu0
        %v2764 = vpop.trf.xlu0
        %v2765 = vpop.trf.xlu0
        %v2766 = vpop.trf.xlu0
        %v2767 = vpop.trf.xlu0
        %v2768 = vpop.trf.xlu0
        %v2769 = vpop.trf.xlu0
        %v2770 = vpop.trf.xlu0
        %v2771 = vadd.f32 %v2723, %v443
        %v2772 = vadd.f32 %v2755, %v444
        %v2773 = vadd.f32 %v2724, %v445
        %v2774 = vadd.f32 %v2756, %v446
        %v2775 = vadd.f32 %v2725, %v447
        %v2776 = vadd.f32 %v2757, %v448
        %v2777 = vadd.f32 %v2726, %v449
        %v2778 = vadd.f32 %v2758, %v450
        %v2779 = vadd.f32 %v2727, %v451
        %v2780 = vadd.f32 %v2759, %v452
        %v2781 = vadd.f32 %v2728, %v453
        %v2782 = vadd.f32 %v2760, %v454
        %v2783 = vadd.f32 %v2729, %v455
        %v2784 = vadd.f32 %v2761, %v456
        %v2785 = vadd.f32 %v2730, %v457
        %v2786 = vadd.f32 %v2762, %v458
        %2787 = vst [vmem:[%s436] sm:$0xff] %v2771
        %2788 = vst [vmem:[%s436 + $0x8] sm:$0xff] %v2772
        %2789 = vst [vmem:[%s436 + $0x10] sm:$0xff] %v2773
        %2790 = vst [vmem:[%s436 + $0x18] sm:$0xff] %v2774
        %2791 = vst [vmem:[%s436 + $0x20] sm:$0xff] %v2775
        %2792 = vst [vmem:[%s436 + $0x28] sm:$0xff] %v2776
        %2793 = vst [vmem:[%s436 + $0x30] sm:$0xff] %v2777
        %2794 = vst [vmem:[%s436 + $0x38] sm:$0xff] %v2778
        %2795 = vst [vmem:[%s436 + $0x40] sm:$0xff] %v2779
        %2796 = vst [vmem:[%s436 + $0x48] sm:$0xff] %v2780
        %2797 = vst [vmem:[%s436 + $0x50] sm:$0xff] %v2781
        %2798 = vst [vmem:[%s436 + $0x58] sm:$0xff] %v2782
        %2799 = vst [vmem:[%s436 + $0x60] sm:$0xff] %v2783
        %2800 = vst [vmem:[%s436 + $0x68] sm:$0xff] %v2784
        %2801 = vst [vmem:[%s436 + $0x70] sm:$0xff] %v2785
        %2802 = vst [vmem:[%s436 + $0x78] sm:$0xff] %v2786
        %s2803 = sand.u32 %s272, 1
        %s2804 = scalar_lea.sflag [#allocation4], %s2803
        %s2805 = sand.u32 %s272, 1
        %s2806 = smul.addr %s2805, 128
        %s2807 = scalar_lea.vmem [#allocation10], %s2806
        // Predicated region
        $region81: #{tpu_custom_call.1} parent=63 // pred_check
          %p2808 = pneg %p282
        $region82: #{tpu_custom_call.1} parent=63 // pred_check_branch
          %2810 = sbr.rel (%p2808) target = $region84
        $region83: #{tpu_custom_call.1} parent=63 // pred_region
          %s2812 = ssub.s32 2048, 2048
          %2813 = vsyncadd %s2804, %s2812
          %s2814 = smul.addr %s28, 16
          %s2815 = smul.addr %s2814, 128
          %s2816 = scalar_lea.hbm %s11, %s2815
          %s2817 = sshll.u32 %s2807, 4
          %s2818 = int_to_ptr.vmem [resolvable:$true] %s2817
          %2823 = dma.vmem_to_hbm [thread:$0]  %s2818, 2048, %s2816, %s2804, 256, 256, 16
        $region84: #{tpu_custom_call.1} parent=63 // pred_fallthru
          _
      $region64: #{tpu_custom_call.1} parent=5 // pred_fallthru
        _
      %p2824 = scmp.le.s32.totalorder 2, %s23
      // Predicated region
      $region85: #{tpu_custom_call.1} parent=5 // pred_check
        %p2825 = pneg %p2824
      $region86: #{tpu_custom_call.1} parent=5 // pred_check_branch
        %2827 = sbr.rel (%p2825) target = $region88
      $region87: #{tpu_custom_call.1} parent=5 // pred_region
        %s2828 = ssub.s32 %s23, 2
        // Predicated region
        $region89: #{tpu_custom_call.1} parent=87 // pred_check
          %p2829 = pneg %p288
        $region90: #{tpu_custom_call.1} parent=87 // pred_check_branch
          %2831 = sbr.rel (%p2829) target = $region92
        $region91: #{tpu_custom_call.1} parent=87 // pred_region
          %s2832 = sand.u32 %s273, 1
          %s2833 = scalar_lea.sflag [#allocation4], %s2832
          %s2834 = sand.u32 %s273, 1
          %s2835 = smul.addr %s2834, 128
          %s2836 = scalar_lea.vmem [#allocation10], %s2835
          %2837 = dma.done %s2833, 2048
        $region92: #{tpu_custom_call.1} parent=87 // pred_fallthru
          _
      $region88: #{tpu_custom_call.1} parent=5 // pred_fallthru
        _
    $region6: #{tpu_custom_call.1} parent=1 // loop_footer
      %s27 = sadd.s32 1, %s23
    $region7: #{tpu_custom_call.1} parent=1 // loop_footer_branch
      %22 = sbr.rel target = $region3
    $region8: #{tpu_custom_call.1} parent=1 // loop_exit
      _
    %2838 = vsyncpa [#allocation3], 1
    %s2839 = scalar_lea.sflag [#allocation3], 1
    %2840 = vsyncpa %s2839, 1
    %2841 = vsyncpa [#allocation6], 1
    %2842 = vsyncpa [#allocation9], 1
    %2843 = vsyncpa [#allocation4], 1
    %s2844 = scalar_lea.sflag [#allocation4], 1
    %2845 = vsyncpa %s2844, 1

</llo_original>
